<compile_context>
chip_gen: v7x
topology: tpu7x:2x2x1
jax: 0.10.0
libtpu: 0.0.40
codegen_flags: <defaults>
</compile_context>

<pallas_src>
import numpy as np
import jax
import jax.numpy as jnp
from jax.experimental import pallas as pl
from jax.experimental.pallas import tpu as pltpu


# ----------------------------------------------------------------------------
# Pallas kernels
# ----------------------------------------------------------------------------
def _mm_bias_relu_kernel(a_ref, w_ref, b_ref, o_ref):
    acc = jnp.dot(a_ref[...], w_ref[...], preferred_element_type=jnp.float32)
    acc = acc + b_ref[...]
    o_ref[...] = jnp.maximum(acc, 0.0).astype(o_ref.dtype)


def matmul_bias_relu(a, w, bias, *, tm):
    """a: (M, K) bf16, w: (K, N) bf16, bias: (1, N) f32 -> (M, N) f32."""
    M, K = a.shape
    _, N = w.shape
    assert M % tm == 0
    return pl.pallas_call(
        _mm_bias_relu_kernel,
        out_shape=jax.ShapeDtypeStruct((M, N), jnp.float32),
        grid=(M // tm,),
        in_specs=[
            pl.BlockSpec((tm, K), lambda i: (i, 0)),
            pl.BlockSpec((K, N), lambda i: (0, 0)),
            pl.BlockSpec((1, N), lambda i: (0, 0)),
        ],
        out_specs=pl.BlockSpec((tm, N), lambda i: (i, 0)),
        compiler_params=pltpu.CompilerParams(dimension_semantics=("parallel",)),
    )(a, w, bias)


def _group_mm_bias_relu_kernel(a_ref, w_ref, b_ref, o_ref):
    # Per-group conv-as-matmul (embedding already folded into the weight) +
    # bias + ReLU.  The patch tile is shared across groups and stays resident.
    acc = jnp.dot(a_ref[...], w_ref[0], preferred_element_type=jnp.float32)
    acc = acc + b_ref[...]
    o_ref[...] = jnp.maximum(acc, 0.0).astype(o_ref.dtype)


def group_matmul_bias_relu(patches, w_g, bias, *, tm):
    """patches: (M, K) bf16 shared across groups; w_g: (G, K, N) bf16;
    bias: (1, N) f32 -> (G*M, N) f32.  Row block for group g at g*M + rows."""
    M, K = patches.shape
    G, _, N = w_g.shape
    assert M % tm == 0
    MB = M // tm
    return pl.pallas_call(
        _group_mm_bias_relu_kernel,
        out_shape=jax.ShapeDtypeStruct((G * M, N), jnp.float32),
        # Row tile outer, group inner: the patch block index depends only on m,
        # so it is not re-fetched across the G inner iterations.
        grid=(MB, G),
        in_specs=[
            pl.BlockSpec((tm, K), lambda m, g: (m, 0)),
            pl.BlockSpec((1, K, N), lambda m, g: (g, 0, 0)),
            pl.BlockSpec((1, N), lambda m, g: (0, 0)),
        ],
        out_specs=pl.BlockSpec((tm, N), lambda m, g: (g * MB + m, 0)),
        compiler_params=pltpu.CompilerParams(
            dimension_semantics=("parallel", "arbitrary")),
    )(patches, w_g, bias)


def _head_cls_kernel(a_ref, wh_ref, bh_ref, wc_ref, bc_ref, o_ref):
    # Head conv3x3 (as matmul) + ReLU, with all 1x1 classifiers fused as a
    # second dot on the still-resident VMEM tile (lane-dense 128-wide output).
    h = jnp.dot(a_ref[...], wh_ref[...], preferred_element_type=jnp.float32)
    h = jnp.maximum(h + bh_ref[...], 0.0)
    out = jnp.dot(h.astype(wc_ref.dtype), wc_ref[...],
                  preferred_element_type=jnp.float32)
    o_ref[...] = (out + bc_ref[...]).astype(o_ref.dtype)


def head_cls_conv(patches, w_head, b_head, w_cls, b_cls, *, tm):
    M, K = patches.shape
    _, Nh = w_head.shape
    _, Nc = w_cls.shape
    assert M % tm == 0
    return pl.pallas_call(
        _head_cls_kernel,
        out_shape=jax.ShapeDtypeStruct((M, Nc), jnp.float32),
        grid=(M // tm,),
        in_specs=[
            pl.BlockSpec((tm, K), lambda i: (i, 0)),
            pl.BlockSpec((K, Nh), lambda i: (0, 0)),
            pl.BlockSpec((1, Nh), lambda i: (0, 0)),
            pl.BlockSpec((Nh, Nc), lambda i: (0, 0)),
            pl.BlockSpec((1, Nc), lambda i: (0, 0)),
        ],
        out_specs=pl.BlockSpec((tm, Nc), lambda i: (i, 0)),
        compiler_params=pltpu.CompilerParams(dimension_semantics=("parallel",)),
    )(patches, w_head, b_head, w_cls, b_cls)


# ----------------------------------------------------------------------------
# Plain-JAX glue (NHWC im2col, weight layout)
# ----------------------------------------------------------------------------
def im2col_3x3(x_nhwc):
    """x: (B, H, W, C) -> (B*H*W, 9*C), 'same' padding, (ki,kj)-major columns."""
    B, H, W, C = x_nhwc.shape
    xp = jnp.pad(x_nhwc, ((0, 0), (1, 1), (1, 1), (0, 0)))
    slabs = [xp[:, i:i + H, j:j + W, :] for i in range(3) for j in range(3)]
    return jnp.concatenate(slabs, axis=-1).reshape(B * H * W, 9 * C)


def conv3x3_w_to_mat(w):
    """(Cout, Cin, 3, 3) -> (9*Cin, Cout), matching im2col_3x3 column order."""
    Cout, Cin, kh, kw = w.shape
    return jnp.transpose(w, (2, 3, 1, 0)).reshape(kh * kw * Cin, Cout)


def _round_up(x, m):
    return ((x + m - 1) // m) * m


# ----------------------------------------------------------------------------
# CsNet forward (inference path), single jitted graph
# ----------------------------------------------------------------------------
def build_csnet_forward(tree):
    obj_with_parts = list(tree["obj_with_parts"])
    sections = list(tree["sections"])
    n_obj = tree["n_obj"]
    n_groups = 1 + len(obj_with_parts)          # group 0 = object path
    n_cls = n_obj + sum(sections)
    NCLS_PAD = 128                              # lane-dense classifier output
    assert n_cls <= NCLS_PAD

    # Column offsets of each object's part classifier in the fused output.
    offsets = []
    start = n_obj
    for s in sections:
        offsets.append((start, start + s))
        start += s

    def device_forward(params, img):
        B, _, H, W = img.shape
        M = B * H * W
        tm = 256
        while M % tm:
            tm //= 2
        assert tm >= 8

        # NHWC internal layout (channels on the lane axis).
        x = jnp.transpose(img, (0, 2, 3, 1))

        # ifn: identity (TODO(synk): real feature stem needs external `body`).

        # ---- bottom-up conv3x3 + ReLU (single pass, reused by all groups) ----
        pat = im2col_3x3(x)                                  # (M, 9*Cin)
        k_bu = pat.shape[1]
        k_pad = _round_up(k_bu, 8)                           # aligned loads
        pat = jnp.pad(pat, ((0, 0), (0, k_pad - k_bu)))
        w_bu = jnp.pad(conv3x3_w_to_mat(params["w_bu"]),
                       ((0, k_pad - k_bu), (0, 0)))
        x_rows = matmul_bias_relu(pat.astype(jnp.bfloat16),
                                  w_bu.astype(jnp.bfloat16),
                                  params["b_bu"].reshape(1, -1), tm=tm)
        c_feat = x_rows.shape[1]
        x_bu = x_rows.reshape(B, H, W, c_feat)

        # ---- TD conv3x3 + ReLU with the embedding modulation folded into the
        #      per-group weights (valid for emb_op == mul); all groups batched
        #      on a grid axis (group 0: embedding[0]; groups 1..: embedding[o]
        #      for each object-with-parts) ----
        idx = jnp.array([0] + obj_with_parts, jnp.int32)
        emb = params["embedding"][idx]                       # (G, c_feat)
        scale_col = jnp.tile(emb, (1, 9))                    # (G, 9*c_feat)
        w_td = conv3x3_w_to_mat(params["w_td"])              # (9*c_feat, td_ni)
        w_td_g = w_td[None] * scale_col[:, :, None]          # (G, K, td_ni)
        pat_td = im2col_3x3(x_bu)                            # (M, 9*c_feat)
        td = group_matmul_bias_relu(pat_td.astype(jnp.bfloat16),
                                    w_td_g.astype(jnp.bfloat16),
                                    params["b_td"].reshape(1, -1),
                                    tm=tm)                   # (G*M, td_ni)
        td_ni = td.shape[1]

        # ---- head conv3x3 + ReLU with all 1x1 classifiers fused in-kernel ----
        pat_h = im2col_3x3(td.reshape(n_groups * B, H, W, td_ni))
        w_head = conv3x3_w_to_mat(params["w_head"])
        w_cls = [params["w_cls_obj"].reshape(n_obj, td_ni).T]
        b_cls = [params["b_cls_obj"]]
        for wp, bp in zip(params["w_cls_part"], params["b_cls_part"]):
            w_cls.append(wp.reshape(wp.shape[0], td_ni).T)
            b_cls.append(bp)
        w_cls = jnp.pad(jnp.concatenate(w_cls, axis=1),
                        ((0, 0), (0, NCLS_PAD - n_cls)))
        b_cls = jnp.pad(jnp.concatenate(b_cls),
                        (0, NCLS_PAD - n_cls)).reshape(1, NCLS_PAD)
        out = head_cls_conv(pat_h.astype(jnp.bfloat16),
                            w_head.astype(jnp.bfloat16),
                            params["b_head"].reshape(1, -1),
                            w_cls.astype(jnp.bfloat16),
                            b_cls, tm=tm)                    # (G*M, NCLS_PAD)
        out = out.reshape(n_groups, B, H, W, NCLS_PAD)

        # Object prediction (group 0, object-classifier columns), NCHW.
        obj_nhwc = out[0, ..., :n_obj]
        obj_pred = jnp.transpose(obj_nhwc, (0, 3, 1, 2))

        # On-device presence flags (replaces the mid-forward .unique() sync).
        obj_arg = jnp.argmax(obj_nhwc, axis=-1)              # (B, H, W)
        present = jnp.stack([jnp.any(obj_arg == o) for o in obj_with_parts])

        # Per-object part predictions (group g+1, that object's columns), NCHW.
        parts = tuple(
            jnp.transpose(out[g + 1, ..., s:e], (0, 3, 1, 2))
            for g, (s, e) in enumerate(offsets))
        return obj_pred, parts, present

    return jax.jit(device_forward)


# ----------------------------------------------------------------------------
# Deterministic parameter construction
# ----------------------------------------------------------------------------
def make_params(key, c_in, c_feat, td_ni, n_obj, sections):
    ks = jax.random.split(key, 16)
    s = 0.1
    params = {
        "w_bu": s * jax.random.normal(ks[0], (c_feat, c_in, 3, 3), jnp.float32),
        "b_bu": s * jax.random.normal(ks[1], (c_feat,), jnp.float32),
        "embedding": jax.random.normal(ks[2], (n_obj, c_feat), jnp.float32),
        "w_td": s * jax.random.normal(ks[3], (td_ni, c_feat, 3, 3), jnp.float32),
        "b_td": s * jax.random.normal(ks[4], (td_ni,), jnp.float32),
        "w_head": s * jax.random.normal(ks[5], (td_ni, td_ni, 3, 3), jnp.float32),
        "b_head": s * jax.random.normal(ks[6], (td_ni,), jnp.float32),
        "w_cls_obj": s * jax.random.normal(ks[7], (n_obj, td_ni, 1, 1), jnp.float32),
        "b_cls_obj": s * jax.random.normal(ks[8], (n_obj,), jnp.float32),
        "w_cls_part": [],
        "b_cls_part": [],
    }
    for i, n_parts in enumerate(sections):
        params["w_cls_part"].append(
            s * jax.random.normal(ks[9 + 2 * i], (n_parts, td_ni, 1, 1), jnp.float32))
        params["b_cls_part"].append(
            s * jax.random.normal(ks[10 + 2 * i], (n_parts,), jnp.float32))
    return params


if __name__ == "__main__":
    # Small ObjectTree: 4 object classes, objects 1 and 3 have parts (3 and 2).
    tree_dict = {1: [0, 1, 2], 3: [0, 1]}
    obj_with_parts = sorted(tree_dict.keys())
    tree = {
        "obj_with_parts": obj_with_parts,
        "obj2idx": {o: i for i, o in enumerate(obj_with_parts)},
        "sections": [len(tree_dict[o]) for o in obj_with_parts],
        "n_obj": 4,
    }

    B, C_IN, H, W = 2, 3, 16, 16
    C_FEAT = 32   # channels[-1] -> embedding dim
    TD_NI = 32    # td_head in_channels

    key = jax.random.PRNGKey(0)
    k_img, k_par = jax.random.split(key)
    img = jax.random.normal(k_img, (B, C_IN, H, W), jnp.float32)
    params = make_params(k_par, C_IN, C_FEAT, TD_NI, tree["n_obj"], tree["sections"])

    fwd = build_csnet_forward(tree)
    obj_pred, parts, present = fwd(params, img)
    jax.block_until_ready((obj_pred, parts, present))

    # Single host read at the very end to build the data-dependent dict
    # (mirrors the PyTorch `.unique()` filtering semantics).
    present_np = np.asarray(present)
    part_pred = {o: parts[i] for i, o in enumerate(obj_with_parts)
                 if bool(present_np[i])}

    assert obj_pred.shape == (B, tree["n_obj"], H, W)
    for i, o in enumerate(obj_with_parts):
        assert parts[i].shape == (B, tree["sections"][i], H, W)
    for o, v in part_pred.items():
        assert v.shape == (B, tree["sections"][tree["obj2idx"][o]], H, W)
    print("KERNEL_OK")
</pallas_src>

<mosaic_0001>
module attributes {stable_mosaic.version = 11 : i64} {
  func.func @_mm_bias_relu_kernel(%arg0: i32, %arg1: memref<256x32xbf16, #tpu.memory_space<vmem>>, %arg2: memref<32x32xbf16, #tpu.memory_space<vmem>>, %arg3: memref<1x32xf32, #tpu.memory_space<vmem>>, %arg4: memref<256x32xf32, #tpu.memory_space<vmem>>) attributes {dimension_semantics = [#tpu.dimension_semantics<parallel>], iteration_bounds = array<i64: 2>, scalar_prefetch = 0 : i64, scratch_operands = 0 : i64, tpu.core_type = #tpu.core_type<tc>, window_params = [{transform_indices = @transform_0, window_bounds = array<i64: 256, 32>}, {pipeline_mode = #tpu.pipeline_mode<synchronous>, transform_indices = @transform_1, window_bounds = array<i64: 32, 32>}, {pipeline_mode = #tpu.pipeline_mode<synchronous>, transform_indices = @transform_2, window_bounds = array<i64: 1, 32>}, {transform_indices = @transform_3, window_bounds = array<i64: 256, 32>}]} {
    %c0 = arith.constant 0 : index
    %c0_0 = arith.constant 0 : index
    %0 = vector.load %arg1[%c0, %c0_0] : memref<256x32xbf16, #tpu.memory_space<vmem>>, vector<256x32xbf16>
    %c0_1 = arith.constant 0 : index
    %c0_2 = arith.constant 0 : index
    %1 = vector.load %arg2[%c0_1, %c0_2] : memref<32x32xbf16, #tpu.memory_space<vmem>>, vector<32x32xbf16>
    %cst = arith.constant dense<0.000000e+00> : vector<256x32xf32>
    %2 = tpu.matmul %0, %1, %cst {dimension_numbers = #tpu.dot_dimension_numbers<[1], [0], [0], [1], [0, 0, 1, 1], [], []>} : vector<256x32xbf16>, vector<32x32xbf16>, vector<256x32xf32> -> vector<256x32xf32>
    %c0_3 = arith.constant 0 : index
    %c0_4 = arith.constant 0 : index
    %3 = vector.load %arg3[%c0_3, %c0_4] : memref<1x32xf32, #tpu.memory_space<vmem>>, vector<1x32xf32>
    %4 = vector.broadcast %3 : vector<1x32xf32> to vector<256x32xf32>
    %5 = arith.addf %2, %4 : vector<256x32xf32>
    %cst_5 = arith.constant 0.000000e+00 : f32
    %6 = vector.broadcast %cst_5 : f32 to vector<256x32xf32>
    %7 = arith.maximumf %5, %6 : vector<256x32xf32>
    %c0_6 = arith.constant 0 : index
    %c0_7 = arith.constant 0 : index
    %8 = vector.load %arg4[%c0_6, %c0_7] : memref<256x32xf32, #tpu.memory_space<vmem>>, vector<256x32xf32>
    tpu.vector_store %arg4[%c0_6, %c0_7], %7 {strides = array<i32>} : memref<256x32xf32, #tpu.memory_space<vmem>>, vector<256x32xf32>,
    return
  }
  func.func @transform_0(%arg0: i32) -> (i32, i32) {
    %c0_i32 = arith.constant 0 : i32
    %c0_i32_0 = arith.constant 0 : i32
    return %arg0, %c0_i32 : i32, i32
  }
  func.func @transform_1(%arg0: i32) -> (i32, i32) {
    %c0_i32 = arith.constant 0 : i32
    %c0_i32_0 = arith.constant 0 : i32
    %c0_i32_1 = arith.constant 0 : i32
    return %c0_i32, %c0_i32_0 : i32, i32
  }
  func.func @transform_2(%arg0: i32) -> (i32, i32) {
    %c0_i32 = arith.constant 0 : i32
    %c0_i32_0 = arith.constant 0 : i32
    %c0_i32_1 = arith.constant 0 : i32
    return %c0_i32, %c0_i32_0 : i32, i32
  }
  func.func @transform_3(%arg0: i32) -> (i32, i32) {
    %c0_i32 = arith.constant 0 : i32
    %c0_i32_0 = arith.constant 0 : i32
    return %arg0, %c0_i32 : i32, i32
  }
}

module attributes {stable_mosaic.version = 11 : i64} {
  func.func @_group_mm_bias_relu_kernel(%arg0: i32, %arg1: i32, %arg2: memref<256x288xbf16, #tpu.memory_space<vmem>>, %arg3: memref<1x288x32xbf16, #tpu.memory_space<vmem>>, %arg4: memref<1x32xf32, #tpu.memory_space<vmem>>, %arg5: memref<256x32xf32, #tpu.memory_space<vmem>>) attributes {dimension_semantics = [#tpu.dimension_semantics<parallel>, #tpu.dimension_semantics<arbitrary>], iteration_bounds = array<i64: 2, 3>, scalar_prefetch = 0 : i64, scratch_operands = 0 : i64, tpu.core_type = #tpu.core_type<tc>, window_params = [{transform_indices = @transform_0, window_bounds = array<i64: 256, 288>}, {transform_indices = @transform_1, window_bounds = array<i64: 1, 288, 32>}, {pipeline_mode = #tpu.pipeline_mode<synchronous>, transform_indices = @transform_2, window_bounds = array<i64: 1, 32>}, {transform_indices = @transform_3, window_bounds = array<i64: 256, 32>}]} {
    %c0 = arith.constant 0 : index
    %c0_0 = arith.constant 0 : index
    %0 = vector.load %arg2[%c0, %c0_0] : memref<256x288xbf16, #tpu.memory_space<vmem>>, vector<256x288xbf16>
    %c0_1 = arith.constant 0 : index
    %c0_2 = arith.constant 0 : index
    %c0_3 = arith.constant 0 : index
    %1 = vector.load %arg3[%c0_1, %c0_2, %c0_3] : memref<1x288x32xbf16, #tpu.memory_space<vmem>>, vector<1x288x32xbf16>
    %2 = vector.shape_cast %1 : vector<1x288x32xbf16> to vector<288x32xbf16>
    %cst = arith.constant dense<0.000000e+00> : vector<256x32xf32>
    %3 = tpu.matmul %0, %2, %cst {dimension_numbers = #tpu.dot_dimension_numbers<[1], [0], [0], [1], [0, 0, 1, 1], [], []>} : vector<256x288xbf16>, vector<288x32xbf16>, vector<256x32xf32> -> vector<256x32xf32>
    %c0_4 = arith.constant 0 : index
    %c0_5 = arith.constant 0 : index
    %4 = vector.load %arg4[%c0_4, %c0_5] : memref<1x32xf32, #tpu.memory_space<vmem>>, vector<1x32xf32>
    %5 = vector.broadcast %4 : vector<1x32xf32> to vector<256x32xf32>
    %6 = arith.addf %3, %5 : vector<256x32xf32>
    %cst_6 = arith.constant 0.000000e+00 : f32
    %7 = vector.broadcast %cst_6 : f32 to vector<256x32xf32>
    %8 = arith.maximumf %6, %7 : vector<256x32xf32>
    %c0_7 = arith.constant 0 : index
    %c0_8 = arith.constant 0 : index
    %9 = vector.load %arg5[%c0_7, %c0_8] : memref<256x32xf32, #tpu.memory_space<vmem>>, vector<256x32xf32>
    tpu.vector_store %arg5[%c0_7, %c0_8], %8 {strides = array<i32>} : memref<256x32xf32, #tpu.memory_space<vmem>>, vector<256x32xf32>,
    return
  }
  func.func @transform_0(%arg0: i32, %arg1: i32) -> (i32, i32) {
    %c0_i32 = arith.constant 0 : i32
    %c0_i32_0 = arith.constant 0 : i32
    return %arg0, %c0_i32 : i32, i32
  }
  func.func @transform_1(%arg0: i32, %arg1: i32) -> (i32, i32, i32) {
    %c0_i32 = arith.constant 0 : i32
    %c0_i32_0 = arith.constant 0 : i32
    %c0_i32_1 = arith.constant 0 : i32
    return %arg1, %c0_i32, %c0_i32_0 : i32, i32, i32
  }
  func.func @transform_2(%arg0: i32, %arg1: i32) -> (i32, i32) {
    %c0_i32 = arith.constant 0 : i32
    %c0_i32_0 = arith.constant 0 : i32
    %c0_i32_1 = arith.constant 0 : i32
    return %c0_i32, %c0_i32_0 : i32, i32
  }
  func.func @transform_3(%arg0: i32, %arg1: i32) -> (i32, i32) {
    %c2_i32 = arith.constant 2 : i32
    %0 = arith.muli %arg1, %c2_i32 : i32
    %1 = arith.addi %0, %arg0 : i32
    %c0_i32 = arith.constant 0 : i32
    %c0_i32_0 = arith.constant 0 : i32
    return %1, %c0_i32 : i32, i32
  }
}

module attributes {stable_mosaic.version = 11 : i64} {
  func.func @_head_cls_kernel(%arg0: i32, %arg1: memref<256x288xbf16, #tpu.memory_space<vmem>>, %arg2: memref<288x32xbf16, #tpu.memory_space<vmem>>, %arg3: memref<1x32xf32, #tpu.memory_space<vmem>>, %arg4: memref<32x128xbf16, #tpu.memory_space<vmem>>, %arg5: memref<1x128xf32, #tpu.memory_space<vmem>>, %arg6: memref<256x128xf32, #tpu.memory_space<vmem>>) attributes {dimension_semantics = [#tpu.dimension_semantics<parallel>], iteration_bounds = array<i64: 6>, scalar_prefetch = 0 : i64, scratch_operands = 0 : i64, tpu.core_type = #tpu.core_type<tc>, window_params = [{transform_indices = @transform_0, window_bounds = array<i64: 256, 288>}, {pipeline_mode = #tpu.pipeline_mode<synchronous>, transform_indices = @transform_1, window_bounds = array<i64: 288, 32>}, {pipeline_mode = #tpu.pipeline_mode<synchronous>, transform_indices = @transform_2, window_bounds = array<i64: 1, 32>}, {pipeline_mode = #tpu.pipeline_mode<synchronous>, transform_indices = @transform_3, window_bounds = array<i64: 32, 128>}, {pipeline_mode = #tpu.pipeline_mode<synchronous>, transform_indices = @transform_4, window_bounds = array<i64: 1, 128>}, {transform_indices = @transform_5, window_bounds = array<i64: 256, 128>}]} {
    %c0 = arith.constant 0 : index
    %c0_0 = arith.constant 0 : index
    %0 = vector.load %arg1[%c0, %c0_0] : memref<256x288xbf16, #tpu.memory_space<vmem>>, vector<256x288xbf16>
    %c0_1 = arith.constant 0 : index
    %c0_2 = arith.constant 0 : index
    %1 = vector.load %arg2[%c0_1, %c0_2] : memref<288x32xbf16, #tpu.memory_space<vmem>>, vector<288x32xbf16>
    %cst = arith.constant dense<0.000000e+00> : vector<256x32xf32>
    %2 = tpu.matmul %0, %1, %cst {dimension_numbers = #tpu.dot_dimension_numbers<[1], [0], [0], [1], [0, 0, 1, 1], [], []>} : vector<256x288xbf16>, vector<288x32xbf16>, vector<256x32xf32> -> vector<256x32xf32>
    %c0_3 = arith.constant 0 : index
    %c0_4 = arith.constant 0 : index
    %3 = vector.load %arg3[%c0_3, %c0_4] : memref<1x32xf32, #tpu.memory_space<vmem>>, vector<1x32xf32>
    %4 = vector.broadcast %3 : vector<1x32xf32> to vector<256x32xf32>
    %5 = arith.addf %2, %4 : vector<256x32xf32>
    %cst_5 = arith.constant 0.000000e+00 : f32
    %6 = vector.broadcast %cst_5 : f32 to vector<256x32xf32>
    %7 = arith.maximumf %5, %6 : vector<256x32xf32>
    %8 = arith.truncf %7 : vector<256x32xf32> to vector<256x32xbf16>
    %c0_6 = arith.constant 0 : index
    %c0_7 = arith.constant 0 : index
    %9 = vector.load %arg4[%c0_6, %c0_7] : memref<32x128xbf16, #tpu.memory_space<vmem>>, vector<32x128xbf16>
    %cst_8 = arith.constant dense<0.000000e+00> : vector<256x128xf32>
    %10 = tpu.matmul %8, %9, %cst_8 {dimension_numbers = #tpu.dot_dimension_numbers<[1], [0], [0], [1], [0, 0, 1, 1], [], []>} : vector<256x32xbf16>, vector<32x128xbf16>, vector<256x128xf32> -> vector<256x128xf32>
    %c0_9 = arith.constant 0 : index
    %c0_10 = arith.constant 0 : index
    %11 = vector.load %arg5[%c0_9, %c0_10] : memref<1x128xf32, #tpu.memory_space<vmem>>, vector<1x128xf32>
    %12 = vector.broadcast %11 : vector<1x128xf32> to vector<256x128xf32>
    %13 = arith.addf %10, %12 : vector<256x128xf32>
    %c0_11 = arith.constant 0 : index
    %c0_12 = arith.constant 0 : index
    %14 = vector.load %arg6[%c0_11, %c0_12] : memref<256x128xf32, #tpu.memory_space<vmem>>, vector<256x128xf32>
    tpu.vector_store %arg6[%c0_11, %c0_12], %13 {strides = array<i32>} : memref<256x128xf32, #tpu.memory_space<vmem>>, vector<256x128xf32>,
    return
  }
  func.func @transform_0(%arg0: i32) -> (i32, i32) {
    %c0_i32 = arith.constant 0 : i32
    %c0_i32_0 = arith.constant 0 : i32
    return %arg0, %c0_i32 : i32, i32
  }
  func.func @transform_1(%arg0: i32) -> (i32, i32) {
    %c0_i32 = arith.constant 0 : i32
    %c0_i32_0 = arith.constant 0 : i32
    %c0_i32_1 = arith.constant 0 : i32
    return %c0_i32, %c0_i32_0 : i32, i32
  }
  func.func @transform_2(%arg0: i32) -> (i32, i32) {
    %c0_i32 = arith.constant 0 : i32
    %c0_i32_0 = arith.constant 0 : i32
    %c0_i32_1 = arith.constant 0 : i32
    return %c0_i32, %c0_i32_0 : i32, i32
  }
  func.func @transform_3(%arg0: i32) -> (i32, i32) {
    %c0_i32 = arith.constant 0 : i32
    %c0_i32_0 = arith.constant 0 : i32
    %c0_i32_1 = arith.constant 0 : i32
    return %c0_i32, %c0_i32_0 : i32, i32
  }
  func.func @transform_4(%arg0: i32) -> (i32, i32) {
    %c0_i32 = arith.constant 0 : i32
    %c0_i32_0 = arith.constant 0 : i32
    %c0_i32_1 = arith.constant 0 : i32
    return %c0_i32, %c0_i32_0 : i32, i32
  }
  func.func @transform_5(%arg0: i32) -> (i32, i32) {
    %c0_i32 = arith.constant 0 : i32
    %c0_i32_0 = arith.constant 0 : i32
    return %arg0, %c0_i32 : i32, i32
  }
}

</mosaic_0001>

<llo_original>
// kernel: device_forward.3
$region0: #{device_forward.3}
  #allocation0 [shape = 'u32[]', space=smem, size = 0x4, offset = 0x4, fixed_abs, tag = 'smem constant byte address 0x4 - core index']
  #allocation1 [shape = 'u32[144,128]{1,0:T(1,128)}', space=vmem, size = 0x12000, scoped, tag = 'internal scratch']
  %s0 = inlined_call_operand.vmem [shape: bf16[512,32], index: 0, kind: input, shape index: {}]
  %s1 = inlined_call_operand.vmem [shape: bf16[32,32], index: 1, kind: input, shape index: {}]
  %s2 = inlined_call_operand.vmem [shape: f32[1,32], index: 2, kind: input, shape index: {}]
  %s3 = inlined_call_operand.vmem [shape: f32[512,32], index: 3, kind: output, shape index: {}]
  %s4 = sld [smem:[#allocation0]]
  $region45: #{device_forward.3} parent=0
    _
  %s6 = ssub.s32 1, %s4
  %s7 = scalar_select 0, %s6, %s4
  loop: start=0, step=1, limit=4
  $region2: #{device_forward.3} parent=0 // loop_pre_header
    _
  $region3: #{device_forward.3} parent=0 // loop_header
    %s9 = sphi 0, %s13
    %p10 = scmp.ge.s32.totalorder %s9, 4
    %s19 = sphi 0, %s21
    %s22 = sphi 0, %s19
    %s23 = sphi 0, %s22
    %s39 = sphi 0, %s23
    %s43 = sphi 0, %s43
    %s45 = sphi 0, %s43
    %s46 = sphi 0, %s45
    %s60 = sphi 0, %s46
    %s64 = sphi 0, %s64
    %s66 = sphi 0, %s64
    %s67 = sphi 0, %s66
    %s81 = sphi 0, %s67
    %s87 = sphi 0, %s89
    %s90 = sphi 0, %s87
    %s91 = sphi 0, %s90
    %s107 = sphi 0, %s91
  $region4: #{device_forward.3} parent=0 // loop_header_branch
    %12 = sbr.rel (%p10) target = $region8
  $region5: #{device_forward.3} parent=0 // loop_body
    %s14 = ssub.s32 %s9, 1
    %s15 = ssub.s32 %s9, 2
    %s16 = sadd.s32 %s9, 1
    %s17 = ssub.s32 %s9, %s16
    %p18 = scmp.eq.s32.totalorder %s17, 0
    %s20 = sadd.s32 %s19, 1
    %s21 = scalar_select %p18, %s19, %s20
    %p24 = pneg %p18
    %p25 = scmp.eq.s32.totalorder %s9, 1
    %p26 = por %p24, %p25
    %p27 = scmp.ne.s32.totalorder %s19, %s22
    %p28 = scmp.eq.s32.totalorder %s9, 0
    %p29 = por %p27, %p28
    %p30 = scmp.ne.s32.totalorder %s19, %s22
    %p31 = scmp.eq.s32.totalorder %s14, 1
    %p32 = por %p30, %p31
    %p33 = scmp.ne.s32.totalorder %s22, %s23
    %p34 = scmp.eq.s32.totalorder %s14, 0
    %p35 = por %p33, %p34
    %p36 = scmp.ne.s32.totalorder %s22, %s23
    %p37 = scmp.eq.s32.totalorder %s15, 1
    %p38 = por %p36, %p37
    %p40 = scmp.ne.s32.totalorder %s23, %s39
    %p41 = scmp.eq.s32.totalorder %s15, 0
    %p42 = por %p40, %p41
    %s44 = sadd.s32 %s43, 1
    %p47 = scmp.eq.s32.totalorder %s9, 1
    %p48 = scmp.ne.s32.totalorder %s43, %s45
    %p49 = scmp.eq.s32.totalorder %s9, 0
    %p50 = por %p48, %p49
    %p51 = scmp.ne.s32.totalorder %s43, %s45
    %p52 = scmp.eq.s32.totalorder %s14, 1
    %p53 = por %p51, %p52
    %p54 = scmp.ne.s32.totalorder %s45, %s46
    %p55 = scmp.eq.s32.totalorder %s14, 0
    %p56 = por %p54, %p55
    %p57 = scmp.ne.s32.totalorder %s45, %s46
    %p58 = scmp.eq.s32.totalorder %s15, 1
    %p59 = por %p57, %p58
    %p61 = scmp.ne.s32.totalorder %s46, %s60
    %p62 = scmp.eq.s32.totalorder %s15, 0
    %p63 = por %p61, %p62
    %s65 = sadd.s32 %s64, 1
    %p68 = scmp.eq.s32.totalorder %s9, 1
    %p69 = scmp.ne.s32.totalorder %s64, %s66
    %p70 = scmp.eq.s32.totalorder %s9, 0
    %p71 = por %p69, %p70
    %p72 = scmp.ne.s32.totalorder %s64, %s66
    %p73 = scmp.eq.s32.totalorder %s14, 1
    %p74 = por %p72, %p73
    %p75 = scmp.ne.s32.totalorder %s66, %s67
    %p76 = scmp.eq.s32.totalorder %s14, 0
    %p77 = por %p75, %p76
    %p78 = scmp.ne.s32.totalorder %s66, %s67
    %p79 = scmp.eq.s32.totalorder %s15, 1
    %p80 = por %p78, %p79
    %p82 = scmp.ne.s32.totalorder %s67, %s81
    %p83 = scmp.eq.s32.totalorder %s15, 0
    %p84 = por %p82, %p83
    %s85 = ssub.s32 %s9, %s16
    %p86 = scmp.eq.s32.totalorder %s85, 0
    %s88 = sadd.s32 %s87, 1
    %s89 = scalar_select %p86, %s87, %s88
    %p92 = pneg %p86
    %p93 = scmp.eq.s32.totalorder %s9, 1
    %p94 = por %p92, %p93
    %p95 = scmp.ne.s32.totalorder %s87, %s90
    %p96 = scmp.eq.s32.totalorder %s9, 0
    %p97 = por %p95, %p96
    %p98 = scmp.ne.s32.totalorder %s87, %s90
    %p99 = scmp.eq.s32.totalorder %s14, 1
    %p100 = por %p98, %p99
    %p101 = scmp.ne.s32.totalorder %s90, %s91
    %p102 = scmp.eq.s32.totalorder %s14, 0
    %p103 = por %p101, %p102
    %p104 = scmp.ne.s32.totalorder %s90, %s91
    %p105 = scmp.eq.s32.totalorder %s15, 1
    %p106 = por %p104, %p105
    %p108 = scmp.ne.s32.totalorder %s91, %s107
    %p109 = scmp.eq.s32.totalorder %s15, 0
    %p110 = por %p108, %p109
    %p111 = scmp.le.s32.totalorder 1, %s9
    %p112 = scmp.lt.s32.totalorder %s9, 3
    %p113 = pnand %p111, %p112
    %p114 = pneg %p113
    // Predicated region
    $region9: #{device_forward.3} parent=5 // pred_check
      _
    $region10: #{device_forward.3} parent=5 // pred_check_branch
      %116 = sbr.rel (%p113) target = $region12
    $region11: #{device_forward.3} parent=5 // pred_region
      %s117 = ssub.s32 %s9, 1
      // Predicated region
      $region13: #{device_forward.3} parent=11 // pred_check
        %p118 = pneg %p56
      $region14: #{device_forward.3} parent=11 // pred_check_branch
        %120 = sbr.rel (%p118) target = $region16
      $region15: #{device_forward.3} parent=11 // pred_region
        _
      $region16: #{device_forward.3} parent=11 // pred_fallthru
        _
      // Predicated region
      $region17: #{device_forward.3} parent=11 // pred_check
        %p121 = pneg %p77
      $region18: #{device_forward.3} parent=11 // pred_check_branch
        %123 = sbr.rel (%p121) target = $region20
      $region19: #{device_forward.3} parent=11 // pred_region
        _
      $region20: #{device_forward.3} parent=11 // pred_fallthru
        _
    $region12: #{device_forward.3} parent=5 // pred_fallthru
      _
    %p124 = scmp.lt.s32.totalorder %s9, 2
    // Predicated region
    $region21: #{device_forward.3} parent=5 // pred_check
      %p125 = pneg %p124
    $region22: #{device_forward.3} parent=5 // pred_check_branch
      %127 = sbr.rel (%p125) target = $region24
    $region23: #{device_forward.3} parent=5 // pred_region
      // Predicated region
      $region25: #{device_forward.3} parent=23 // pred_check
        %p128 = pneg %p29
      $region26: #{device_forward.3} parent=23 // pred_check_branch
        %130 = sbr.rel (%p128) target = $region28
      $region27: #{device_forward.3} parent=23 // pred_region
        %s131 = smul.u32 32, %s9
        %p132 = scmp.lt.s32.totalorder %s131, 63
        %s133 = scalar_select %p132, %s131, 63
        %s134 = smul.addr %s133, 4
        %s135 = scalar_lea.vmem %s0, %s134
        %s136 = smul.u32 32, %s9
      $region28: #{device_forward.3} parent=23 // pred_fallthru
        _
    $region24: #{device_forward.3} parent=5 // pred_fallthru
      _
    %p137 = scmp.le.s32.totalorder 1, %s9
    %p138 = scmp.lt.s32.totalorder %s9, 3
    %p139 = pnand %p137, %p138
    %p140 = pneg %p139
    // Predicated region
    $region29: #{device_forward.3} parent=5 // pred_check
      _
    $region30: #{device_forward.3} parent=5 // pred_check_branch
      %142 = sbr.rel (%p139) target = $region32
    $region31: #{device_forward.3} parent=5 // pred_region
      %s143 = ssub.s32 %s9, 1
      %s144 = smul.u32 32, %s14
      %p145 = scmp.lt.s32.totalorder %s144, 63
      %s146 = scalar_select %p145, %s144, 63
      %s147 = smul.addr %s146, 4
      %s148 = scalar_lea.vmem %s0, %s147
      %p149 = pneg %p35
      %p150 = pneg %p32
      %p151 = pneg %p56
      %p152 = pneg %p53
      %p153 = pneg %p77
      %p154 = pneg %p74
      %p155 = pneg %p103
      %p156 = pneg %p100
      %s157 = smul.u32 32, %s14
      %p158 = scmp.lt.s32.totalorder %s157, 63
      %s159 = scalar_select %p158, %s157, 63
      %s160 = smul.addr %s159, 8
      %s161 = scalar_lea.vmem %s3, %s160
      %s162 = smul.u32 32, %s14
      %p163 = scmp.lt.s32.totalorder %s162, 63
      %s164 = scalar_select %p163, %s162, 63
      %s165 = smul.addr %s164, 4
      %s166 = scalar_lea.vmem %s0, %s165
      %s167 = smul.u32 32, %s14
      %s168 = smul.u32 32, %s14
      %p169 = scmp.lt.s32.totalorder %s168, 63
      %s170 = scalar_select %p169, %s168, 63
      %s171 = smul.addr %s170, 8
      %s172 = scalar_lea.vmem %s3, %s171
      %s173 = smul.u32 32, %s14
      %v175 = vld [vmem:[%s166] sm:$0xf]
      %v176 = vld [vmem:[%s166 + $0x4] sm:$0xf]
      %v177 = vld [vmem:[%s166 + $0x8] sm:$0xf]
      %v178 = vld [vmem:[%s166 + $0xc] sm:$0xf]
      %v179 = vld [vmem:[%s166 + $0x10] sm:$0xf]
      %v180 = vld [vmem:[%s166 + $0x14] sm:$0xf]
      %v181 = vld [vmem:[%s166 + $0x18] sm:$0xf]
      %v182 = vld [vmem:[%s166 + $0x1c] sm:$0xf]
      %v183 = vld [vmem:[%s166 + $0x20] sm:$0xf]
      %v184 = vld [vmem:[%s166 + $0x24] sm:$0xf]
      %v185 = vld [vmem:[%s166 + $0x28] sm:$0xf]
      %v186 = vld [vmem:[%s166 + $0x2c] sm:$0xf]
      %v187 = vld [vmem:[%s166 + $0x30] sm:$0xf]
      %v188 = vld [vmem:[%s166 + $0x34] sm:$0xf]
      %v189 = vld [vmem:[%s166 + $0x38] sm:$0xf]
      %v190 = vld [vmem:[%s166 + $0x3c] sm:$0xf]
      %v191 = vld [vmem:[%s166 + $0x40] sm:$0xf]
      %v192 = vld [vmem:[%s166 + $0x44] sm:$0xf]
      %v193 = vld [vmem:[%s166 + $0x48] sm:$0xf]
      %v194 = vld [vmem:[%s166 + $0x4c] sm:$0xf]
      %v195 = vld [vmem:[%s166 + $0x50] sm:$0xf]
      %v196 = vld [vmem:[%s166 + $0x54] sm:$0xf]
      %v197 = vld [vmem:[%s166 + $0x58] sm:$0xf]
      %v198 = vld [vmem:[%s166 + $0x5c] sm:$0xf]
      %v199 = vld [vmem:[%s166 + $0x60] sm:$0xf]
      %v200 = vld [vmem:[%s166 + $0x64] sm:$0xf]
      %v201 = vld [vmem:[%s166 + $0x68] sm:$0xf]
      %v202 = vld [vmem:[%s166 + $0x6c] sm:$0xf]
      %v203 = vld [vmem:[%s166 + $0x70] sm:$0xf]
      %v204 = vld [vmem:[%s166 + $0x74] sm:$0xf]
      %v205 = vld [vmem:[%s166 + $0x78] sm:$0xf]
      %v206 = vld [vmem:[%s166 + $0x7c] sm:$0xf]
      %v207 = vld [vmem:[%s1] sm:$0xf]
      %v208 = vld [vmem:[%s1 + $0x4] sm:$0xf]
      %v209 = vld [vmem:[%s1 + $0x8] sm:$0xf]
      %v210 = vld [vmem:[%s1 + $0xc] sm:$0xf]
      %v211 = vld [vmem:[%s2] sm:$0x1]
      %v213 = vlaneseq
      %v214 = vshrl.u32 %v213, 7
      %v215 = vsub.s32 0, %v214
      %v216 = vrot.slane %v211, %v215
      %v250 = vunpack.c.l.b16 %v175
      %v251 = vunpack.c.l.b16 %v176
      %v252 = vunpack.c.l.b16 %v177
      %v253 = vunpack.c.l.b16 %v178
      %v254 = vunpack.c.l.b16 %v179
      %v255 = vunpack.c.l.b16 %v180
      %v256 = vunpack.c.l.b16 %v181
      %v257 = vunpack.c.l.b16 %v182
      %v258 = vunpack.c.l.b16 %v183
      %v259 = vunpack.c.l.b16 %v184
      %v260 = vunpack.c.l.b16 %v185
      %v261 = vunpack.c.l.b16 %v186
      %v262 = vunpack.c.l.b16 %v187
      %v263 = vunpack.c.l.b16 %v188
      %v264 = vunpack.c.l.b16 %v189
      %v265 = vunpack.c.l.b16 %v190
      %v266 = vunpack.c.l.b16 %v191
      %v267 = vunpack.c.l.b16 %v192
      %v268 = vunpack.c.l.b16 %v193
      %v269 = vunpack.c.l.b16 %v194
      %v270 = vunpack.c.l.b16 %v195
      %v271 = vunpack.c.l.b16 %v196
      %v272 = vunpack.c.l.b16 %v197
      %v273 = vunpack.c.l.b16 %v198
      %v274 = vunpack.c.l.b16 %v199
      %v275 = vunpack.c.l.b16 %v200
      %v276 = vunpack.c.l.b16 %v201
      %v277 = vunpack.c.l.b16 %v202
      %v278 = vunpack.c.l.b16 %v203
      %v279 = vunpack.c.l.b16 %v204
      %v280 = vunpack.c.l.b16 %v205
      %v281 = vunpack.c.l.b16 %v206
      %v282 = vpack.c.b16 %v251, %v250
      %v283 = vpack.c.b16 %v253, %v252
      %v284 = vpack.c.b16 %v255, %v254
      %v285 = vpack.c.b16 %v257, %v256
      %v286 = vpack.c.b16 %v259, %v258
      %v287 = vpack.c.b16 %v261, %v260
      %v288 = vpack.c.b16 %v263, %v262
      %v289 = vpack.c.b16 %v265, %v264
      %v290 = vpack.c.b16 %v267, %v266
      %v291 = vpack.c.b16 %v269, %v268
      %v292 = vpack.c.b16 %v271, %v270
      %v293 = vpack.c.b16 %v273, %v272
      %v294 = vpack.c.b16 %v275, %v274
      %v295 = vpack.c.b16 %v277, %v276
      %v296 = vpack.c.b16 %v279, %v278
      %v297 = vpack.c.b16 %v281, %v280
      %v302 = vunpack.c.l.b16 %v207
      %v303 = vunpack.c.l.b16 %v208
      %v304 = vunpack.c.l.b16 %v209
      %v305 = vunpack.c.l.b16 %v210
      %v306 = vpack.c.b16 %v303, %v302
      %v307 = vpack.c.b16 %v305, %v304
      %vm310 = vcmask 261120
      %v312 = vsel %vm310, %v282, 0
      %v315 = vsel %vm310, %v283, 0
      %v318 = vsel %vm310, %v284, 0
      %v321 = vsel %vm310, %v285, 0
      %v324 = vsel %vm310, %v286, 0
      %v327 = vsel %vm310, %v287, 0
      %v330 = vsel %vm310, %v288, 0
      %v333 = vsel %vm310, %v289, 0
      %v336 = vsel %vm310, %v290, 0
      %v339 = vsel %vm310, %v291, 0
      %v342 = vsel %vm310, %v292, 0
      %v345 = vsel %vm310, %v293, 0
      %v348 = vsel %vm310, %v294, 0
      %v351 = vsel %vm310, %v295, 0
      %v354 = vsel %vm310, %v296, 0
      %v357 = vsel %vm310, %v297, 0
      %359 = vmatprep.subr.bf16.mxu0 0
      %360 = vmatpush1.bf16.msra.mxu0 %v306
      %361 = vmatprep.subr.bf16.mxu0 0
      %362 = vmatpush1.bf16.msra.mxu0 %v307
      %363 = vmatprep.subr.bf16.mxu0 0
      %364 = vmatpush1.bf16.msra.mxu0 0
      %365 = vmatprep.subr.bf16.mxu0 0
      %366 = vmatpush1.bf16.msra.mxu0 0
      %367 = vmatprep.subr.bf16.mxu0 0
      %368 = vmatpush1.bf16.msra.mxu0 0
      %369 = vmatprep.subr.bf16.mxu0 0
      %370 = vmatpush1.bf16.msra.mxu0 0
      %371 = vmatprep.subr.bf16.mxu0 0
      %372 = vmatpush1.bf16.msra.mxu0 0
      %373 = vmatprep.subr.bf16.mxu0 0
      %374 = vmatpush1.bf16.msra.mxu0 0
      %375 = vmatprep.subr.bf16.mxu0 0
      %376 = vmatpush1.bf16.msra.mxu0 0
      %377 = vmatprep.subr.bf16.mxu0 0
      %378 = vmatpush1.bf16.msra.mxu0 0
      %379 = vmatprep.subr.bf16.mxu0 0
      %380 = vmatpush1.bf16.msra.mxu0 0
      %381 = vmatprep.subr.bf16.mxu0 0
      %382 = vmatpush1.bf16.msra.mxu0 0
      %383 = vmatprep.subr.bf16.mxu0 0
      %384 = vmatpush1.bf16.msra.mxu0 0
      %385 = vmatprep.subr.bf16.mxu0 0
      %386 = vmatpush1.bf16.msra.mxu0 0
      %387 = vmatprep.subr.bf16.mxu0 0
      %388 = vmatpush1.bf16.msra.mxu0 0
      %389 = vmatprep.subr.bf16.mxu0 0
      %390 = vmatpush1.bf16.msra.mxu0 0
      %391 = vmatprep.mubr.bf16.mxu0 0
      %392 = vmatmul.mubr.bf16.gmra.mrb[0].mxu0 %v312
      %v393 = vpop.f32.mrb[0].mxu0
      %v394 = vadd.f32 %v216, %v393
      %v395 = vpop.f32.mrb[0].mxu0
      %v396 = vpop.f32.mrb[0].mxu0
      %v397 = vadd.f32 %v216, %v396
      %v398 = vpop.f32.mrb[0].mxu0
      %399 = vmatprep.mubr.bf16.mxu0 0
      %400 = vmatmul.mubr.bf16.gmra.mrb[0].mxu0 %v315
      %v401 = vpop.f32.mrb[0].mxu0
      %v402 = vadd.f32 %v216, %v401
      %v403 = vpop.f32.mrb[0].mxu0
      %v404 = vpop.f32.mrb[0].mxu0
      %v405 = vadd.f32 %v216, %v404
      %v406 = vpop.f32.mrb[0].mxu0
      %407 = vmatprep.mubr.bf16.mxu0 0
      %408 = vmatmul.mubr.bf16.gmra.mrb[0].mxu0 %v318
      %v409 = vpop.f32.mrb[0].mxu0
      %v410 = vadd.f32 %v216, %v409
      %v411 = vpop.f32.mrb[0].mxu0
      %v412 = vpop.f32.mrb[0].mxu0
      %v413 = vadd.f32 %v216, %v412
      %v414 = vpop.f32.mrb[0].mxu0
      %415 = vmatprep.mubr.bf16.mxu0 0
      %416 = vmatmul.mubr.bf16.gmra.mrb[0].mxu0 %v321
      %v417 = vpop.f32.mrb[0].mxu0
      %v418 = vadd.f32 %v216, %v417
      %v419 = vpop.f32.mrb[0].mxu0
      %v420 = vpop.f32.mrb[0].mxu0
      %v421 = vadd.f32 %v216, %v420
      %v422 = vpop.f32.mrb[0].mxu0
      %423 = vmatprep.mubr.bf16.mxu0 0
      %424 = vmatmul.mubr.bf16.gmra.mrb[0].mxu0 %v324
      %v425 = vpop.f32.mrb[0].mxu0
      %v426 = vadd.f32 %v216, %v425
      %v427 = vpop.f32.mrb[0].mxu0
      %v428 = vpop.f32.mrb[0].mxu0
      %v429 = vadd.f32 %v216, %v428
      %v430 = vpop.f32.mrb[0].mxu0
      %431 = vmatprep.mubr.bf16.mxu0 0
      %432 = vmatmul.mubr.bf16.gmra.mrb[0].mxu0 %v327
      %v433 = vpop.f32.mrb[0].mxu0
      %v434 = vadd.f32 %v216, %v433
      %v435 = vpop.f32.mrb[0].mxu0
      %v436 = vpop.f32.mrb[0].mxu0
      %v437 = vadd.f32 %v216, %v436
      %v438 = vpop.f32.mrb[0].mxu0
      %439 = vmatprep.mubr.bf16.mxu0 0
      %440 = vmatmul.mubr.bf16.gmra.mrb[0].mxu0 %v330
      %v441 = vpop.f32.mrb[0].mxu0
      %v442 = vadd.f32 %v216, %v441
      %v443 = vpop.f32.mrb[0].mxu0
      %v444 = vpop.f32.mrb[0].mxu0
      %v445 = vadd.f32 %v216, %v444
      %v446 = vpop.f32.mrb[0].mxu0
      %447 = vmatprep.mubr.bf16.mxu0 0
      %448 = vmatmul.mubr.bf16.gmra.mrb[0].mxu0 %v333
      %v449 = vpop.f32.mrb[0].mxu0
      %v450 = vadd.f32 %v216, %v449
      %v451 = vpop.f32.mrb[0].mxu0
      %v452 = vpop.f32.mrb[0].mxu0
      %v453 = vadd.f32 %v216, %v452
      %v454 = vpop.f32.mrb[0].mxu0
      %455 = vmatprep.mubr.bf16.mxu0 0
      %456 = vmatmul.mubr.bf16.gmra.mrb[0].mxu0 %v336
      %v457 = vpop.f32.mrb[0].mxu0
      %v458 = vadd.f32 %v216, %v457
      %v459 = vpop.f32.mrb[0].mxu0
      %v460 = vpop.f32.mrb[0].mxu0
      %v461 = vadd.f32 %v216, %v460
      %v462 = vpop.f32.mrb[0].mxu0
      %463 = vmatprep.mubr.bf16.mxu0 0
      %464 = vmatmul.mubr.bf16.gmra.mrb[0].mxu0 %v339
      %v465 = vpop.f32.mrb[0].mxu0
      %v466 = vadd.f32 %v216, %v465
      %v467 = vpop.f32.mrb[0].mxu0
      %v468 = vpop.f32.mrb[0].mxu0
      %v469 = vadd.f32 %v216, %v468
      %v470 = vpop.f32.mrb[0].mxu0
      %471 = vmatprep.mubr.bf16.mxu0 0
      %472 = vmatmul.mubr.bf16.gmra.mrb[0].mxu0 %v342
      %v473 = vpop.f32.mrb[0].mxu0
      %v474 = vadd.f32 %v216, %v473
      %v475 = vpop.f32.mrb[0].mxu0
      %v476 = vpop.f32.mrb[0].mxu0
      %v477 = vadd.f32 %v216, %v476
      %v478 = vpop.f32.mrb[0].mxu0
      %479 = vmatprep.mubr.bf16.mxu0 0
      %480 = vmatmul.mubr.bf16.gmra.mrb[0].mxu0 %v345
      %v481 = vpop.f32.mrb[0].mxu0
      %v482 = vadd.f32 %v216, %v481
      %v483 = vpop.f32.mrb[0].mxu0
      %v484 = vpop.f32.mrb[0].mxu0
      %v485 = vadd.f32 %v216, %v484
      %v486 = vpop.f32.mrb[0].mxu0
      %487 = vmatprep.mubr.bf16.mxu0 0
      %488 = vmatmul.mubr.bf16.gmra.mrb[0].mxu0 %v348
      %v489 = vpop.f32.mrb[0].mxu0
      %v490 = vadd.f32 %v216, %v489
      %v491 = vpop.f32.mrb[0].mxu0
      %v492 = vpop.f32.mrb[0].mxu0
      %v493 = vadd.f32 %v216, %v492
      %v494 = vpop.f32.mrb[0].mxu0
      %495 = vmatprep.mubr.bf16.mxu0 0
      %496 = vmatmul.mubr.bf16.gmra.mrb[0].mxu0 %v351
      %v497 = vpop.f32.mrb[0].mxu0
      %v498 = vadd.f32 %v216, %v497
      %v499 = vpop.f32.mrb[0].mxu0
      %v500 = vpop.f32.mrb[0].mxu0
      %v501 = vadd.f32 %v216, %v500
      %v502 = vpop.f32.mrb[0].mxu0
      %503 = vmatprep.mubr.bf16.mxu0 0
      %504 = vmatmul.mubr.bf16.gmra.mrb[0].mxu0 %v354
      %v505 = vpop.f32.mrb[0].mxu0
      %v506 = vadd.f32 %v216, %v505
      %v507 = vpop.f32.mrb[0].mxu0
      %v508 = vpop.f32.mrb[0].mxu0
      %v509 = vadd.f32 %v216, %v508
      %v510 = vpop.f32.mrb[0].mxu0
      %511 = vmatprep.mubr.bf16.mxu0 0
      %512 = vmatmul.mubr.bf16.gmra.mrb[0].mxu0 %v357
      %v513 = vpop.f32.mrb[0].mxu0
      %v514 = vadd.f32 %v216, %v513
      %v515 = vpop.f32.mrb[0].mxu0
      %v516 = vpop.f32.mrb[0].mxu0
      %v517 = vadd.f32 %v216, %v516
      %v518 = vpop.f32.mrb[0].mxu0
      %519 = vdwg.mxu0
      %v520 = vmax.f32 %v394, 0.0
      %v521 = vmax.f32 %v397, 0.0
      %v522 = vmax.f32 %v402, 0.0
      %v523 = vmax.f32 %v405, 0.0
      %v524 = vmax.f32 %v410, 0.0
      %v525 = vmax.f32 %v413, 0.0
      %v526 = vmax.f32 %v418, 0.0
      %v527 = vmax.f32 %v421, 0.0
      %v528 = vmax.f32 %v426, 0.0
      %v529 = vmax.f32 %v429, 0.0
      %v530 = vmax.f32 %v434, 0.0
      %v531 = vmax.f32 %v437, 0.0
      %v532 = vmax.f32 %v442, 0.0
      %v533 = vmax.f32 %v445, 0.0
      %v534 = vmax.f32 %v450, 0.0
      %v535 = vmax.f32 %v453, 0.0
      %v536 = vmax.f32 %v458, 0.0
      %v537 = vmax.f32 %v461, 0.0
      %v538 = vmax.f32 %v466, 0.0
      %v539 = vmax.f32 %v469, 0.0
      %v540 = vmax.f32 %v474, 0.0
      %v541 = vmax.f32 %v477, 0.0
      %v542 = vmax.f32 %v482, 0.0
      %v543 = vmax.f32 %v485, 0.0
      %v544 = vmax.f32 %v490, 0.0
      %v545 = vmax.f32 %v493, 0.0
      %v546 = vmax.f32 %v498, 0.0
      %v547 = vmax.f32 %v501, 0.0
      %v548 = vmax.f32 %v506, 0.0
      %v549 = vmax.f32 %v509, 0.0
      %v550 = vmax.f32 %v514, 0.0
      %v551 = vmax.f32 %v517, 0.0
      %552 = vst.msk [vmem:[%s172] sm:$0xff] %vm310, %v520
      %553 = vst.msk [vmem:[%s172 + $0x8] sm:$0xff] %vm310, %v521
      %554 = vst.msk [vmem:[%s172 + $0x10] sm:$0xff] %vm310, %v522
      %555 = vst.msk [vmem:[%s172 + $0x18] sm:$0xff] %vm310, %v523
      %556 = vst.msk [vmem:[%s172 + $0x20] sm:$0xff] %vm310, %v524
      %557 = vst.msk [vmem:[%s172 + $0x28] sm:$0xff] %vm310, %v525
      %558 = vst.msk [vmem:[%s172 + $0x30] sm:$0xff] %vm310, %v526
      %559 = vst.msk [vmem:[%s172 + $0x38] sm:$0xff] %vm310, %v527
      %560 = vst.msk [vmem:[%s172 + $0x40] sm:$0xff] %vm310, %v528
      %561 = vst.msk [vmem:[%s172 + $0x48] sm:$0xff] %vm310, %v529
      %562 = vst.msk [vmem:[%s172 + $0x50] sm:$0xff] %vm310, %v530
      %563 = vst.msk [vmem:[%s172 + $0x58] sm:$0xff] %vm310, %v531
      %564 = vst.msk [vmem:[%s172 + $0x60] sm:$0xff] %vm310, %v532
      %565 = vst.msk [vmem:[%s172 + $0x68] sm:$0xff] %vm310, %v533
      %566 = vst.msk [vmem:[%s172 + $0x70] sm:$0xff] %vm310, %v534
      %567 = vst.msk [vmem:[%s172 + $0x78] sm:$0xff] %vm310, %v535
      %568 = vst.msk [vmem:[%s172 + $0x80] sm:$0xff] %vm310, %v536
      %569 = vst.msk [vmem:[%s172 + $0x88] sm:$0xff] %vm310, %v537
      %570 = vst.msk [vmem:[%s172 + $0x90] sm:$0xff] %vm310, %v538
      %571 = vst.msk [vmem:[%s172 + $0x98] sm:$0xff] %vm310, %v539
      %572 = vst.msk [vmem:[%s172 + $0xa0] sm:$0xff] %vm310, %v540
      %573 = vst.msk [vmem:[%s172 + $0xa8] sm:$0xff] %vm310, %v541
      %574 = vst.msk [vmem:[%s172 + $0xb0] sm:$0xff] %vm310, %v542
      %575 = vst.msk [vmem:[%s172 + $0xb8] sm:$0xff] %vm310, %v543
      %576 = vst.msk [vmem:[%s172 + $0xc0] sm:$0xff] %vm310, %v544
      %577 = vst.msk [vmem:[%s172 + $0xc8] sm:$0xff] %vm310, %v545
      %578 = vst.msk [vmem:[%s172 + $0xd0] sm:$0xff] %vm310, %v546
      %579 = vst.msk [vmem:[%s172 + $0xd8] sm:$0xff] %vm310, %v547
      %580 = vst.msk [vmem:[%s172 + $0xe0] sm:$0xff] %vm310, %v548
      %581 = vst.msk [vmem:[%s172 + $0xe8] sm:$0xff] %vm310, %v549
      %582 = vst.msk [vmem:[%s172 + $0xf0] sm:$0xff] %vm310, %v550
      %583 = vst.msk [vmem:[%s172 + $0xf8] sm:$0xff] %vm310, %v551
      %s584 = smul.u32 32, %s14
      %p585 = scmp.lt.s32.totalorder %s584, 63
      %s586 = scalar_select %p585, %s584, 63
      %s587 = smul.addr %s586, 8
      %s588 = scalar_lea.vmem %s3, %s587
      // Predicated region
      $region33: #{device_forward.3} parent=31 // pred_check
        %p589 = pneg %p100
      $region34: #{device_forward.3} parent=31 // pred_check_branch
        %591 = sbr.rel (%p589) target = $region36
      $region35: #{device_forward.3} parent=31 // pred_region
        %s592 = smul.u32 32, %s14
      $region36: #{device_forward.3} parent=31 // pred_fallthru
        _
    $region32: #{device_forward.3} parent=5 // pred_fallthru
      _
    %p593 = scmp.le.s32.totalorder 2, %s9
    // Predicated region
    $region37: #{device_forward.3} parent=5 // pred_check
      %p594 = pneg %p593
    $region38: #{device_forward.3} parent=5 // pred_check_branch
      %596 = sbr.rel (%p594) target = $region40
    $region39: #{device_forward.3} parent=5 // pred_region
      %s597 = ssub.s32 %s9, 2
      // Predicated region
      $region41: #{device_forward.3} parent=39 // pred_check
        %p598 = pneg %p106
      $region42: #{device_forward.3} parent=39 // pred_check_branch
        %600 = sbr.rel (%p598) target = $region44
      $region43: #{device_forward.3} parent=39 // pred_region
        %s601 = smul.u32 32, %s15
        %p602 = scmp.lt.s32.totalorder %s601, 63
        %s603 = scalar_select %p602, %s601, 63
        %s604 = smul.addr %s603, 8
        %s605 = scalar_lea.vmem %s3, %s604
      $region44: #{device_forward.3} parent=39 // pred_fallthru
        _
    $region40: #{device_forward.3} parent=5 // pred_fallthru
      _
  $region6: #{device_forward.3} parent=0 // loop_footer
    %s13 = sadd.s32 1, %s9
  $region7: #{device_forward.3} parent=0 // loop_footer_branch
    %8 = sbr.rel target = $region3
  $region8: #{device_forward.3} parent=0 // loop_exit
    _

// kernel: device_forward.4
$region0: #{device_forward.4}
  #allocation0 [shape = 'u32[]', space=smem, size = 0x4, offset = 0x4, fixed_abs, tag = 'smem constant byte address 0x4 - core index']
  #allocation1 [shape = 'u32[144,128]{1,0:T(1,128)}', space=vmem, size = 0x12000, scoped, tag = 'internal scratch']
  %s0 = inlined_call_operand.vmem [shape: bf16[512,288], index: 0, kind: input, shape index: {}]
  %s1 = inlined_call_operand.vmem [shape: bf16[3,288,32], index: 1, kind: input, shape index: {}]
  %s2 = inlined_call_operand.vmem [shape: f32[1,32], index: 2, kind: input, shape index: {}]
  %s3 = inlined_call_operand.vmem [shape: f32[1536,32], index: 3, kind: output, shape index: {}]
  %s4 = sld [smem:[#allocation0]]
  $region45: #{device_forward.4} parent=0
    _
  %s6 = ssub.s32 1, %s4
  %s7 = scalar_select 0, %s6, %s4
  loop: start=0, step=1, limit=8
  $region2: #{device_forward.4} parent=0 // loop_pre_header
    _
  $region3: #{device_forward.4} parent=0 // loop_header
    %s9 = sphi 0, %s13
    %p10 = scmp.ge.s32.totalorder %s9, 8
    %s16 = sphi 0, %s28
    %s17 = sphi 0, %s24
    %s18 = sphi 0, %s16
    %s19 = sphi 0, %s17
    %s20 = sphi 0, %s18
    %s21 = sphi 0, %s19
    %s31 = sphi 0, %s33
    %s34 = sphi 0, %s31
    %s35 = sphi 0, %s34
    %s51 = sphi 0, %s35
    %s57 = sphi 0, %s59
    %s60 = sphi 0, %s57
    %s61 = sphi 0, %s60
    %s77 = sphi 0, %s61
    %s81 = sphi 0, %s81
    %s83 = sphi 0, %s81
    %s84 = sphi 0, %s83
    %s98 = sphi 0, %s84
    %s108 = sphi 0, %s110
    %s111 = sphi 0, %s108
    %s112 = sphi 0, %s111
    %s128 = sphi 0, %s112
  $region4: #{device_forward.4} parent=0 // loop_header_branch
    %12 = sbr.rel (%p10) target = $region8
  $region5: #{device_forward.4} parent=0 // loop_body
    %s14 = ssub.s32 %s9, 1
    %s15 = ssub.s32 %s9, 2
    %s22 = sadd.s32 1, %s17
    %p23 = scmp.ge.s32.totalorder %s22, 3
    %s24 = scalar_select %p23, 0, %s22
    %s25 = sadd.s32 1, %s16
    %s26 = scalar_select %p23, %s25, %s16
    %p27 = scmp.ge.s32.totalorder %s26, 2
    %s28 = scalar_select %p27, 0, %s26
    %s29 = ssub.s32 %s16, %s28
    %p30 = scmp.eq.s32.totalorder %s29, 0
    %s32 = sadd.s32 %s31, 1
    %s33 = scalar_select %p30, %s31, %s32
    %p36 = pneg %p30
    %p37 = scmp.eq.s32.totalorder %s9, 5
    %p38 = por %p36, %p37
    %p39 = scmp.ne.s32.totalorder %s31, %s34
    %p40 = scmp.eq.s32.totalorder %s9, 0
    %p41 = por %p39, %p40
    %p42 = scmp.ne.s32.totalorder %s31, %s34
    %p43 = scmp.eq.s32.totalorder %s14, 5
    %p44 = por %p42, %p43
    %p45 = scmp.ne.s32.totalorder %s34, %s35
    %p46 = scmp.eq.s32.totalorder %s14, 0
    %p47 = por %p45, %p46
    %p48 = scmp.ne.s32.totalorder %s34, %s35
    %p49 = scmp.eq.s32.totalorder %s15, 5
    %p50 = por %p48, %p49
    %p52 = scmp.ne.s32.totalorder %s35, %s51
    %p53 = scmp.eq.s32.totalorder %s15, 0
    %p54 = por %p52, %p53
    %s55 = ssub.s32 %s17, %s24
    %p56 = scmp.eq.s32.totalorder %s55, 0
    %s58 = sadd.s32 %s57, 1
    %s59 = scalar_select %p56, %s57, %s58
    %p62 = pneg %p56
    %p63 = scmp.eq.s32.totalorder %s9, 5
    %p64 = por %p62, %p63
    %p65 = scmp.ne.s32.totalorder %s57, %s60
    %p66 = scmp.eq.s32.totalorder %s9, 0
    %p67 = por %p65, %p66
    %p68 = scmp.ne.s32.totalorder %s57, %s60
    %p69 = scmp.eq.s32.totalorder %s14, 5
    %p70 = por %p68, %p69
    %p71 = scmp.ne.s32.totalorder %s60, %s61
    %p72 = scmp.eq.s32.totalorder %s14, 0
    %p73 = por %p71, %p72
    %p74 = scmp.ne.s32.totalorder %s60, %s61
    %p75 = scmp.eq.s32.totalorder %s15, 5
    %p76 = por %p74, %p75
    %p78 = scmp.ne.s32.totalorder %s61, %s77
    %p79 = scmp.eq.s32.totalorder %s15, 0
    %p80 = por %p78, %p79
    %s82 = sadd.s32 %s81, 1
    %p85 = scmp.eq.s32.totalorder %s9, 5
    %p86 = scmp.ne.s32.totalorder %s81, %s83
    %p87 = scmp.eq.s32.totalorder %s9, 0
    %p88 = por %p86, %p87
    %p89 = scmp.ne.s32.totalorder %s81, %s83
    %p90 = scmp.eq.s32.totalorder %s14, 5
    %p91 = por %p89, %p90
    %p92 = scmp.ne.s32.totalorder %s83, %s84
    %p93 = scmp.eq.s32.totalorder %s14, 0
    %p94 = por %p92, %p93
    %p95 = scmp.ne.s32.totalorder %s83, %s84
    %p96 = scmp.eq.s32.totalorder %s15, 5
    %p97 = por %p95, %p96
    %p99 = scmp.ne.s32.totalorder %s84, %s98
    %p100 = scmp.eq.s32.totalorder %s15, 0
    %p101 = por %p99, %p100
    %s102 = smul.u32 %s17, 2
    %s103 = sadd.s32 %s102, %s16
    %s104 = smul.u32 %s24, 2
    %s105 = sadd.s32 %s104, %s28
    %s106 = ssub.s32 %s103, %s105
    %p107 = scmp.eq.s32.totalorder %s106, 0
    %s109 = sadd.s32 %s108, 1
    %s110 = scalar_select %p107, %s108, %s109
    %p113 = pneg %p107
    %p114 = scmp.eq.s32.totalorder %s9, 5
    %p115 = por %p113, %p114
    %p116 = scmp.ne.s32.totalorder %s108, %s111
    %p117 = scmp.eq.s32.totalorder %s9, 0
    %p118 = por %p116, %p117
    %p119 = scmp.ne.s32.totalorder %s108, %s111
    %p120 = scmp.eq.s32.totalorder %s14, 5
    %p121 = por %p119, %p120
    %p122 = scmp.ne.s32.totalorder %s111, %s112
    %p123 = scmp.eq.s32.totalorder %s14, 0
    %p124 = por %p122, %p123
    %p125 = scmp.ne.s32.totalorder %s111, %s112
    %p126 = scmp.eq.s32.totalorder %s15, 5
    %p127 = por %p125, %p126
    %p129 = scmp.ne.s32.totalorder %s112, %s128
    %p130 = scmp.eq.s32.totalorder %s15, 0
    %p131 = por %p129, %p130
    %p132 = scmp.le.s32.totalorder 1, %s9
    %p133 = scmp.lt.s32.totalorder %s9, 7
    %p134 = pnand %p132, %p133
    %p135 = pneg %p134
    // Predicated region
    $region9: #{device_forward.4} parent=5 // pred_check
      _
    $region10: #{device_forward.4} parent=5 // pred_check_branch
      %137 = sbr.rel (%p134) target = $region12
    $region11: #{device_forward.4} parent=5 // pred_region
      %s138 = ssub.s32 %s9, 1
      // Predicated region
      $region13: #{device_forward.4} parent=11 // pred_check
        %p139 = pneg %p94
      $region14: #{device_forward.4} parent=11 // pred_check_branch
        %141 = sbr.rel (%p139) target = $region16
      $region15: #{device_forward.4} parent=11 // pred_region
        _
      $region16: #{device_forward.4} parent=11 // pred_fallthru
        _
    $region12: #{device_forward.4} parent=5 // pred_fallthru
      _
    %p142 = scmp.lt.s32.totalorder %s9, 6
    // Predicated region
    $region17: #{device_forward.4} parent=5 // pred_check
      %p143 = pneg %p142
    $region18: #{device_forward.4} parent=5 // pred_check_branch
      %145 = sbr.rel (%p143) target = $region20
    $region19: #{device_forward.4} parent=5 // pred_region
      // Predicated region
      $region21: #{device_forward.4} parent=19 // pred_check
        %p146 = pneg %p41
      $region22: #{device_forward.4} parent=19 // pred_check_branch
        %148 = sbr.rel (%p146) target = $region24
      $region23: #{device_forward.4} parent=19 // pred_region
        %s149 = smul.u32 32, %s16
        %p150 = scmp.lt.s32.totalorder %s149, 63
        %s151 = scalar_select %p150, %s149, 63
        %s152 = smul.addr %s151, 3
        %s153 = smul.addr %s152, 4
        %s154 = scalar_lea.vmem %s0, %s153
        %s155 = smul.u32 32, %s16
      $region24: #{device_forward.4} parent=19 // pred_fallthru
        _
      // Predicated region
      $region25: #{device_forward.4} parent=19 // pred_check
        %p156 = pneg %p67
      $region26: #{device_forward.4} parent=19 // pred_check_branch
        %158 = sbr.rel (%p156) target = $region28
      $region27: #{device_forward.4} parent=19 // pred_region
        %p159 = scmp.lt.s32.totalorder %s17, 2
        %s160 = scalar_select %p159, %s17, 2
        %s161 = smul.addr %s160, 36
        %s162 = smul.addr %s161, 4
        %s163 = scalar_lea.vmem %s1, %s162
      $region28: #{device_forward.4} parent=19 // pred_fallthru
        _
    $region20: #{device_forward.4} parent=5 // pred_fallthru
      _
    %p164 = scmp.le.s32.totalorder 1, %s9
    %p165 = scmp.lt.s32.totalorder %s9, 7
    %p166 = pnand %p164, %p165
    %p167 = pneg %p166
    // Predicated region
    $region29: #{device_forward.4} parent=5 // pred_check
      _
    $region30: #{device_forward.4} parent=5 // pred_check_branch
      %169 = sbr.rel (%p166) target = $region32
    $region31: #{device_forward.4} parent=5 // pred_region
      %s170 = ssub.s32 %s9, 1
      %s171 = smul.u32 32, %s18
      %p172 = scmp.lt.s32.totalorder %s171, 63
      %s173 = scalar_select %p172, %s171, 63
      %s174 = smul.addr %s173, 3
      %s175 = smul.addr %s174, 4
      %s176 = scalar_lea.vmem %s0, %s175
      %p177 = pneg %p47
      %p178 = pneg %p44
      %p179 = scmp.lt.s32.totalorder %s19, 2
      %s180 = scalar_select %p179, %s19, 2
      %s181 = smul.addr %s180, 36
      %s182 = smul.addr %s181, 4
      %s183 = scalar_lea.vmem %s1, %s182
      %p184 = pneg %p73
      %p185 = pneg %p70
      %p186 = pneg %p94
      %p187 = pneg %p91
      %p188 = pneg %p124
      %p189 = pneg %p121
      %s190 = smul.u32 %s19, 2
      %s191 = sadd.s32 %s190, %s18
      %s192 = smul.u32 32, %s191
      %p193 = scmp.lt.s32.totalorder %s192, 191
      %s194 = scalar_select %p193, %s192, 191
      %s195 = smul.addr %s194, 8
      %s196 = scalar_lea.vmem %s3, %s195
      %s197 = smul.u32 32, %s18
      %p198 = scmp.lt.s32.totalorder %s197, 63
      %s199 = scalar_select %p198, %s197, 63
      %s200 = smul.addr %s199, 3
      %s201 = smul.addr %s200, 4
      %s202 = scalar_lea.vmem %s0, %s201
      %s203 = smul.u32 32, %s18
      %p204 = scmp.lt.s32.totalorder %s19, 2
      %s205 = scalar_select %p204, %s19, 2
      %s206 = smul.addr %s205, 36
      %s207 = smul.addr %s206, 4
      %s208 = scalar_lea.vmem %s1, %s207
      %s209 = smul.u32 %s19, 2
      %s210 = sadd.s32 %s209, %s18
      %s211 = smul.u32 32, %s210
      %p212 = scmp.lt.s32.totalorder %s211, 191
      %s213 = scalar_select %p212, %s211, 191
      %s214 = smul.addr %s213, 8
      %s215 = scalar_lea.vmem %s3, %s214
      %s216 = smul.u32 %s19, 2
      %s217 = sadd.s32 %s216, %s18
      %s218 = smul.u32 32, %s217
      %v220 = vld [vmem:[%s202] sm:$0xff]
      %v221 = vld [vmem:[%s202 + $0x8] sm:$0xf]
      %v222 = vld [vmem:[%s202 + $0xc] sm:$0xff]
      %v223 = vld [vmem:[%s202 + $0x14] sm:$0xf]
      %v224 = vld [vmem:[%s202 + $0x18] sm:$0xff]
      %v225 = vld [vmem:[%s202 + $0x20] sm:$0xf]
      %v226 = vld [vmem:[%s202 + $0x24] sm:$0xff]
      %v227 = vld [vmem:[%s202 + $0x2c] sm:$0xf]
      %v228 = vld [vmem:[%s202 + $0x30] sm:$0xff]
      %v229 = vld [vmem:[%s202 + $0x38] sm:$0xf]
      %v230 = vld [vmem:[%s202 + $0x3c] sm:$0xff]
      %v231 = vld [vmem:[%s202 + $0x44] sm:$0xf]
      %v232 = vld [vmem:[%s202 + $0x48] sm:$0xff]
      %v233 = vld [vmem:[%s202 + $0x50] sm:$0xf]
      %v234 = vld [vmem:[%s202 + $0x54] sm:$0xff]
      %v235 = vld [vmem:[%s202 + $0x5c] sm:$0xf]
      %v236 = vld [vmem:[%s202 + $0x60] sm:$0xff]
      %v237 = vld [vmem:[%s202 + $0x68] sm:$0xf]
      %v238 = vld [vmem:[%s202 + $0x6c] sm:$0xff]
      %v239 = vld [vmem:[%s202 + $0x74] sm:$0xf]
      %v240 = vld [vmem:[%s202 + $0x78] sm:$0xff]
      %v241 = vld [vmem:[%s202 + $0x80] sm:$0xf]
      %v242 = vld [vmem:[%s202 + $0x84] sm:$0xff]
      %v243 = vld [vmem:[%s202 + $0x8c] sm:$0xf]
      %v244 = vld [vmem:[%s202 + $0x90] sm:$0xff]
      %v245 = vld [vmem:[%s202 + $0x98] sm:$0xf]
      %v246 = vld [vmem:[%s202 + $0x9c] sm:$0xff]
      %v247 = vld [vmem:[%s202 + $0xa4] sm:$0xf]
      %v248 = vld [vmem:[%s202 + $0xa8] sm:$0xff]
      %v249 = vld [vmem:[%s202 + $0xb0] sm:$0xf]
      %v250 = vld [vmem:[%s202 + $0xb4] sm:$0xff]
      %v251 = vld [vmem:[%s202 + $0xbc] sm:$0xf]
      %v252 = vld [vmem:[%s202 + $0xc0] sm:$0xff]
      %v253 = vld [vmem:[%s202 + $0xc8] sm:$0xf]
      %v254 = vld [vmem:[%s202 + $0xcc] sm:$0xff]
      %v255 = vld [vmem:[%s202 + $0xd4] sm:$0xf]
      %v256 = vld [vmem:[%s202 + $0xd8] sm:$0xff]
      %v257 = vld [vmem:[%s202 + $0xe0] sm:$0xf]
      %v258 = vld [vmem:[%s202 + $0xe4] sm:$0xff]
      %v259 = vld [vmem:[%s202 + $0xec] sm:$0xf]
      %v260 = vld [vmem:[%s202 + $0xf0] sm:$0xff]
      %v261 = vld [vmem:[%s202 + $0xf8] sm:$0xf]
      %v262 = vld [vmem:[%s202 + $0xfc] sm:$0xff]
      %v263 = vld [vmem:[%s202 + $0x104] sm:$0xf]
      %v264 = vld [vmem:[%s202 + $0x108] sm:$0xff]
      %v265 = vld [vmem:[%s202 + $0x110] sm:$0xf]
      %v266 = vld [vmem:[%s202 + $0x114] sm:$0xff]
      %v267 = vld [vmem:[%s202 + $0x11c] sm:$0xf]
      %v268 = vld [vmem:[%s202 + $0x120] sm:$0xff]
      %v269 = vld [vmem:[%s202 + $0x128] sm:$0xf]
      %v270 = vld [vmem:[%s202 + $0x12c] sm:$0xff]
      %v271 = vld [vmem:[%s202 + $0x134] sm:$0xf]
      %v272 = vld [vmem:[%s202 + $0x138] sm:$0xff]
      %v273 = vld [vmem:[%s202 + $0x140] sm:$0xf]
      %v274 = vld [vmem:[%s202 + $0x144] sm:$0xff]
      %v275 = vld [vmem:[%s202 + $0x14c] sm:$0xf]
      %v276 = vld [vmem:[%s202 + $0x150] sm:$0xff]
      %v277 = vld [vmem:[%s202 + $0x158] sm:$0xf]
      %v278 = vld [vmem:[%s202 + $0x15c] sm:$0xff]
      %v279 = vld [vmem:[%s202 + $0x164] sm:$0xf]
      %v280 = vld [vmem:[%s202 + $0x168] sm:$0xff]
      %v281 = vld [vmem:[%s202 + $0x170] sm:$0xf]
      %v282 = vld [vmem:[%s202 + $0x174] sm:$0xff]
      %v283 = vld [vmem:[%s202 + $0x17c] sm:$0xf]
      %v284 = vld [vmem:[%s208] sm:$0xf]
      %v285 = vld [vmem:[%s208 + $0x4] sm:$0xf]
      %v286 = vld [vmem:[%s208 + $0x8] sm:$0xf]
      %v287 = vld [vmem:[%s208 + $0xc] sm:$0xf]
      %v288 = vld [vmem:[%s208 + $0x10] sm:$0xf]
      %v289 = vld [vmem:[%s208 + $0x14] sm:$0xf]
      %v290 = vld [vmem:[%s208 + $0x18] sm:$0xf]
      %v291 = vld [vmem:[%s208 + $0x1c] sm:$0xf]
      %v292 = vld [vmem:[%s208 + $0x20] sm:$0xf]
      %v293 = vld [vmem:[%s208 + $0x24] sm:$0xf]
      %v294 = vld [vmem:[%s208 + $0x28] sm:$0xf]
      %v295 = vld [vmem:[%s208 + $0x2c] sm:$0xf]
      %v296 = vld [vmem:[%s208 + $0x30] sm:$0xf]
      %v297 = vld [vmem:[%s208 + $0x34] sm:$0xf]
      %v298 = vld [vmem:[%s208 + $0x38] sm:$0xf]
      %v299 = vld [vmem:[%s208 + $0x3c] sm:$0xf]
      %v300 = vld [vmem:[%s208 + $0x40] sm:$0xf]
      %v301 = vld [vmem:[%s208 + $0x44] sm:$0xf]
      %v302 = vld [vmem:[%s208 + $0x48] sm:$0xf]
      %v303 = vld [vmem:[%s208 + $0x4c] sm:$0xf]
      %v304 = vld [vmem:[%s208 + $0x50] sm:$0xf]
      %v305 = vld [vmem:[%s208 + $0x54] sm:$0xf]
      %v306 = vld [vmem:[%s208 + $0x58] sm:$0xf]
      %v307 = vld [vmem:[%s208 + $0x5c] sm:$0xf]
      %v308 = vld [vmem:[%s208 + $0x60] sm:$0xf]
      %v309 = vld [vmem:[%s208 + $0x64] sm:$0xf]
      %v310 = vld [vmem:[%s208 + $0x68] sm:$0xf]
      %v311 = vld [vmem:[%s208 + $0x6c] sm:$0xf]
      %v312 = vld [vmem:[%s208 + $0x70] sm:$0xf]
      %v313 = vld [vmem:[%s208 + $0x74] sm:$0xf]
      %v314 = vld [vmem:[%s208 + $0x78] sm:$0xf]
      %v315 = vld [vmem:[%s208 + $0x7c] sm:$0xf]
      %v316 = vld [vmem:[%s208 + $0x80] sm:$0xf]
      %v317 = vld [vmem:[%s208 + $0x84] sm:$0xf]
      %v318 = vld [vmem:[%s208 + $0x88] sm:$0xf]
      %v319 = vld [vmem:[%s208 + $0x8c] sm:$0xf]
      %v320 = vld [vmem:[%s2] sm:$0x1]
      %v322 = vlaneseq
      %v323 = vshrl.u32 %v322, 7
      %v324 = vsub.s32 0, %v323
      %v325 = vrot.slane %v320, %v324
      %v391 = vunpack.c.l.b16 %v220
      %v392 = vunpack.c.h.b16 %v220
      %v393 = vunpack.c.l.b16 %v221
      %v394 = vunpack.c.l.b16 %v222
      %v395 = vunpack.c.h.b16 %v222
      %v396 = vunpack.c.l.b16 %v223
      %v397 = vunpack.c.l.b16 %v224
      %v398 = vunpack.c.h.b16 %v224
      %v399 = vunpack.c.l.b16 %v225
      %v400 = vunpack.c.l.b16 %v226
      %v401 = vunpack.c.h.b16 %v226
      %v402 = vunpack.c.l.b16 %v227
      %v403 = vunpack.c.l.b16 %v228
      %v404 = vunpack.c.h.b16 %v228
      %v405 = vunpack.c.l.b16 %v229
      %v406 = vunpack.c.l.b16 %v230
      %v407 = vunpack.c.h.b16 %v230
      %v408 = vunpack.c.l.b16 %v231
      %v409 = vunpack.c.l.b16 %v232
      %v410 = vunpack.c.h.b16 %v232
      %v411 = vunpack.c.l.b16 %v233
      %v412 = vunpack.c.l.b16 %v234
      %v413 = vunpack.c.h.b16 %v234
      %v414 = vunpack.c.l.b16 %v235
      %v415 = vunpack.c.l.b16 %v236
      %v416 = vunpack.c.h.b16 %v236
      %v417 = vunpack.c.l.b16 %v237
      %v418 = vunpack.c.l.b16 %v238
      %v419 = vunpack.c.h.b16 %v238
      %v420 = vunpack.c.l.b16 %v239
      %v421 = vunpack.c.l.b16 %v240
      %v422 = vunpack.c.h.b16 %v240
      %v423 = vunpack.c.l.b16 %v241
      %v424 = vunpack.c.l.b16 %v242
      %v425 = vunpack.c.h.b16 %v242
      %v426 = vunpack.c.l.b16 %v243
      %v427 = vunpack.c.l.b16 %v244
      %v428 = vunpack.c.h.b16 %v244
      %v429 = vunpack.c.l.b16 %v245
      %v430 = vunpack.c.l.b16 %v246
      %v431 = vunpack.c.h.b16 %v246
      %v432 = vunpack.c.l.b16 %v247
      %v433 = vunpack.c.l.b16 %v248
      %v434 = vunpack.c.h.b16 %v248
      %v435 = vunpack.c.l.b16 %v249
      %v436 = vunpack.c.l.b16 %v250
      %v437 = vunpack.c.h.b16 %v250
      %v438 = vunpack.c.l.b16 %v251
      %v439 = vunpack.c.l.b16 %v252
      %v440 = vunpack.c.h.b16 %v252
      %v441 = vunpack.c.l.b16 %v253
      %v442 = vunpack.c.l.b16 %v254
      %v443 = vunpack.c.h.b16 %v254
      %v444 = vunpack.c.l.b16 %v255
      %v445 = vunpack.c.l.b16 %v256
      %v446 = vunpack.c.h.b16 %v256
      %v447 = vunpack.c.l.b16 %v257
      %v448 = vunpack.c.l.b16 %v258
      %v449 = vunpack.c.h.b16 %v258
      %v450 = vunpack.c.l.b16 %v259
      %v451 = vunpack.c.l.b16 %v260
      %v452 = vunpack.c.h.b16 %v260
      %v453 = vunpack.c.l.b16 %v261
      %v454 = vunpack.c.l.b16 %v262
      %v455 = vunpack.c.h.b16 %v262
      %v456 = vunpack.c.l.b16 %v263
      %v457 = vunpack.c.l.b16 %v264
      %v458 = vunpack.c.h.b16 %v264
      %v459 = vunpack.c.l.b16 %v265
      %v460 = vunpack.c.l.b16 %v266
      %v461 = vunpack.c.h.b16 %v266
      %v462 = vunpack.c.l.b16 %v267
      %v463 = vunpack.c.l.b16 %v268
      %v464 = vunpack.c.h.b16 %v268
      %v465 = vunpack.c.l.b16 %v269
      %v466 = vunpack.c.l.b16 %v270
      %v467 = vunpack.c.h.b16 %v270
      %v468 = vunpack.c.l.b16 %v271
      %v469 = vunpack.c.l.b16 %v272
      %v470 = vunpack.c.h.b16 %v272
      %v471 = vunpack.c.l.b16 %v273
      %v472 = vunpack.c.l.b16 %v274
      %v473 = vunpack.c.h.b16 %v274
      %v474 = vunpack.c.l.b16 %v275
      %v475 = vunpack.c.l.b16 %v276
      %v476 = vunpack.c.h.b16 %v276
      %v477 = vunpack.c.l.b16 %v277
      %v478 = vunpack.c.l.b16 %v278
      %v479 = vunpack.c.h.b16 %v278
      %v480 = vunpack.c.l.b16 %v279
      %v481 = vunpack.c.l.b16 %v280
      %v482 = vunpack.c.h.b16 %v280
      %v483 = vunpack.c.l.b16 %v281
      %v484 = vunpack.c.l.b16 %v282
      %v485 = vunpack.c.h.b16 %v282
      %v486 = vunpack.c.l.b16 %v283
      %v487 = vpack.c.b16 %v394, %v391
      %v488 = vpack.c.b16 %v395, %v392
      %v489 = vpack.c.b16 %v396, %v393
      %v490 = vpack.c.b16 %v400, %v397
      %v491 = vpack.c.b16 %v401, %v398
      %v492 = vpack.c.b16 %v402, %v399
      %v493 = vpack.c.b16 %v406, %v403
      %v494 = vpack.c.b16 %v407, %v404
      %v495 = vpack.c.b16 %v408, %v405
      %v496 = vpack.c.b16 %v412, %v409
      %v497 = vpack.c.b16 %v413, %v410
      %v498 = vpack.c.b16 %v414, %v411
      %v499 = vpack.c.b16 %v418, %v415
      %v500 = vpack.c.b16 %v419, %v416
      %v501 = vpack.c.b16 %v420, %v417
      %v502 = vpack.c.b16 %v424, %v421
      %v503 = vpack.c.b16 %v425, %v422
      %v504 = vpack.c.b16 %v426, %v423
      %v505 = vpack.c.b16 %v430, %v427
      %v506 = vpack.c.b16 %v431, %v428
      %v507 = vpack.c.b16 %v432, %v429
      %v508 = vpack.c.b16 %v436, %v433
      %v509 = vpack.c.b16 %v437, %v434
      %v510 = vpack.c.b16 %v438, %v435
      %v511 = vpack.c.b16 %v442, %v439
      %v512 = vpack.c.b16 %v443, %v440
      %v513 = vpack.c.b16 %v444, %v441
      %v514 = vpack.c.b16 %v448, %v445
      %v515 = vpack.c.b16 %v449, %v446
      %v516 = vpack.c.b16 %v450, %v447
      %v517 = vpack.c.b16 %v454, %v451
      %v518 = vpack.c.b16 %v455, %v452
      %v519 = vpack.c.b16 %v456, %v453
      %v520 = vpack.c.b16 %v460, %v457
      %v521 = vpack.c.b16 %v461, %v458
      %v522 = vpack.c.b16 %v462, %v459
      %v523 = vpack.c.b16 %v466, %v463
      %v524 = vpack.c.b16 %v467, %v464
      %v525 = vpack.c.b16 %v468, %v465
      %v526 = vpack.c.b16 %v472, %v469
      %v527 = vpack.c.b16 %v473, %v470
      %v528 = vpack.c.b16 %v474, %v471
      %v529 = vpack.c.b16 %v478, %v475
      %v530 = vpack.c.b16 %v479, %v476
      %v531 = vpack.c.b16 %v480, %v477
      %v532 = vpack.c.b16 %v484, %v481
      %v533 = vpack.c.b16 %v485, %v482
      %v534 = vpack.c.b16 %v486, %v483
      %v603 = vunpack.c.l.b16 %v284
      %v604 = vunpack.c.l.b16 %v285
      %v605 = vunpack.c.l.b16 %v286
      %v606 = vunpack.c.l.b16 %v287
      %v607 = vunpack.c.l.b16 %v288
      %v608 = vunpack.c.l.b16 %v289
      %v609 = vunpack.c.l.b16 %v290
      %v610 = vunpack.c.l.b16 %v291
      %v611 = vunpack.c.l.b16 %v292
      %v612 = vunpack.c.l.b16 %v293
      %v613 = vunpack.c.l.b16 %v294
      %v614 = vunpack.c.l.b16 %v295
      %v615 = vunpack.c.l.b16 %v296
      %v616 = vunpack.c.l.b16 %v297
      %v617 = vunpack.c.l.b16 %v298
      %v618 = vunpack.c.l.b16 %v299
      %v619 = vunpack.c.l.b16 %v300
      %v620 = vunpack.c.l.b16 %v301
      %v621 = vunpack.c.l.b16 %v302
      %v622 = vunpack.c.l.b16 %v303
      %v623 = vunpack.c.l.b16 %v304
      %v624 = vunpack.c.l.b16 %v305
      %v625 = vunpack.c.l.b16 %v306
      %v626 = vunpack.c.l.b16 %v307
      %v627 = vunpack.c.l.b16 %v308
      %v628 = vunpack.c.l.b16 %v309
      %v629 = vunpack.c.l.b16 %v310
      %v630 = vunpack.c.l.b16 %v311
      %v631 = vunpack.c.l.b16 %v312
      %v632 = vunpack.c.l.b16 %v313
      %v633 = vunpack.c.l.b16 %v314
      %v634 = vunpack.c.l.b16 %v315
      %v635 = vunpack.c.l.b16 %v316
      %v636 = vunpack.c.l.b16 %v317
      %v637 = vunpack.c.l.b16 %v318
      %v638 = vunpack.c.l.b16 %v319
      %v639 = vpack.c.b16 %v604, %v603
      %v640 = vpack.c.b16 %v606, %v605
      %v641 = vpack.c.b16 %v608, %v607
      %v642 = vpack.c.b16 %v610, %v609
      %v643 = vpack.c.b16 %v612, %v611
      %v644 = vpack.c.b16 %v614, %v613
      %v645 = vpack.c.b16 %v616, %v615
      %v646 = vpack.c.b16 %v618, %v617
      %v647 = vpack.c.b16 %v620, %v619
      %v648 = vpack.c.b16 %v622, %v621
      %v649 = vpack.c.b16 %v624, %v623
      %v650 = vpack.c.b16 %v626, %v625
      %v651 = vpack.c.b16 %v628, %v627
      %v652 = vpack.c.b16 %v630, %v629
      %v653 = vpack.c.b16 %v632, %v631
      %v654 = vpack.c.b16 %v634, %v633
      %v655 = vpack.c.b16 %v636, %v635
      %v656 = vpack.c.b16 %v638, %v637
      %vm675 = vcmask 261120
      %v677 = vsel %vm675, %v489, 0
      %v680 = vsel %vm675, %v492, 0
      %v683 = vsel %vm675, %v495, 0
      %v686 = vsel %vm675, %v498, 0
      %v689 = vsel %vm675, %v501, 0
      %v692 = vsel %vm675, %v504, 0
      %v695 = vsel %vm675, %v507, 0
      %v698 = vsel %vm675, %v510, 0
      %v701 = vsel %vm675, %v513, 0
      %v704 = vsel %vm675, %v516, 0
      %v707 = vsel %vm675, %v519, 0
      %v710 = vsel %vm675, %v522, 0
      %v713 = vsel %vm675, %v525, 0
      %v716 = vsel %vm675, %v528, 0
      %v719 = vsel %vm675, %v531, 0
      %v722 = vsel %vm675, %v534, 0
      %724 = vmatprep.subr.bf16.mxu0 0
      %725 = vmatpush1.bf16.msra.mxu0 %v639
      %726 = vmatprep.subr.bf16.mxu0 0
      %727 = vmatpush1.bf16.msra.mxu0 %v640
      %728 = vmatprep.subr.bf16.mxu0 0
      %729 = vmatpush1.bf16.msra.mxu0 %v641
      %730 = vmatprep.subr.bf16.mxu0 0
      %731 = vmatpush1.bf16.msra.mxu0 %v642
      %732 = vmatprep.subr.bf16.mxu0 0
      %733 = vmatpush1.bf16.msra.mxu0 %v643
      %734 = vmatprep.subr.bf16.mxu0 0
      %735 = vmatpush1.bf16.msra.mxu0 %v644
      %736 = vmatprep.subr.bf16.mxu0 0
      %737 = vmatpush1.bf16.msra.mxu0 %v645
      %738 = vmatprep.subr.bf16.mxu0 0
      %739 = vmatpush1.bf16.msra.mxu0 %v646
      %740 = vmatprep.subr.bf16.mxu0 0
      %741 = vmatpush1.bf16.msra.mxu0 %v647
      %742 = vmatprep.subr.bf16.mxu0 0
      %743 = vmatpush1.bf16.msra.mxu0 %v648
      %744 = vmatprep.subr.bf16.mxu0 0
      %745 = vmatpush1.bf16.msra.mxu0 %v649
      %746 = vmatprep.subr.bf16.mxu0 0
      %747 = vmatpush1.bf16.msra.mxu0 %v650
      %748 = vmatprep.subr.bf16.mxu0 0
      %749 = vmatpush1.bf16.msra.mxu0 %v651
      %750 = vmatprep.subr.bf16.mxu0 0
      %751 = vmatpush1.bf16.msra.mxu0 %v652
      %752 = vmatprep.subr.bf16.mxu0 0
      %753 = vmatpush1.bf16.msra.mxu0 %v653
      %754 = vmatprep.subr.bf16.mxu0 0
      %755 = vmatpush1.bf16.msra.mxu0 %v654
      %756 = vmatprep.mubr.bf16.mxu0 %v488
      %757 = vmatmul.mubr.bf16.gmra.mrb[0].mxu0 %v487
      %v758 = vpop.f32.mrb[0].mxu0
      %v759 = vadd.f32 %v325, %v758
      %v760 = vpop.f32.mrb[0].mxu0
      %v761 = vpop.f32.mrb[0].mxu0
      %v762 = vadd.f32 %v325, %v761
      %v763 = vpop.f32.mrb[0].mxu0
      %764 = vmatprep.mubr.bf16.mxu0 %v491
      %765 = vmatmul.mubr.bf16.gmra.mrb[0].mxu0 %v490
      %v766 = vpop.f32.mrb[0].mxu0
      %v767 = vadd.f32 %v325, %v766
      %v768 = vpop.f32.mrb[0].mxu0
      %v769 = vpop.f32.mrb[0].mxu0
      %v770 = vadd.f32 %v325, %v769
      %v771 = vpop.f32.mrb[0].mxu0
      %772 = vmatprep.mubr.bf16.mxu0 %v494
      %773 = vmatmul.mubr.bf16.gmra.mrb[0].mxu0 %v493
      %v774 = vpop.f32.mrb[0].mxu0
      %v775 = vadd.f32 %v325, %v774
      %v776 = vpop.f32.mrb[0].mxu0
      %v777 = vpop.f32.mrb[0].mxu0
      %v778 = vadd.f32 %v325, %v777
      %v779 = vpop.f32.mrb[0].mxu0
      %780 = vmatprep.mubr.bf16.mxu0 %v497
      %781 = vmatmul.mubr.bf16.gmra.mrb[0].mxu0 %v496
      %v782 = vpop.f32.mrb[0].mxu0
      %v783 = vadd.f32 %v325, %v782
      %v784 = vpop.f32.mrb[0].mxu0
      %v785 = vpop.f32.mrb[0].mxu0
      %v786 = vadd.f32 %v325, %v785
      %v787 = vpop.f32.mrb[0].mxu0
      %788 = vmatprep.mubr.bf16.mxu0 %v500
      %789 = vmatmul.mubr.bf16.gmra.mrb[0].mxu0 %v499
      %v790 = vpop.f32.mrb[0].mxu0
      %v791 = vadd.f32 %v325, %v790
      %v792 = vpop.f32.mrb[0].mxu0
      %v793 = vpop.f32.mrb[0].mxu0
      %v794 = vadd.f32 %v325, %v793
      %v795 = vpop.f32.mrb[0].mxu0
      %796 = vmatprep.mubr.bf16.mxu0 %v503
      %797 = vmatmul.mubr.bf16.gmra.mrb[0].mxu0 %v502
      %v798 = vpop.f32.mrb[0].mxu0
      %v799 = vadd.f32 %v325, %v798
      %v800 = vpop.f32.mrb[0].mxu0
      %v801 = vpop.f32.mrb[0].mxu0
      %v802 = vadd.f32 %v325, %v801
      %v803 = vpop.f32.mrb[0].mxu0
      %804 = vmatprep.mubr.bf16.mxu0 %v506
      %805 = vmatmul.mubr.bf16.gmra.mrb[0].mxu0 %v505
      %v806 = vpop.f32.mrb[0].mxu0
      %v807 = vadd.f32 %v325, %v806
      %v808 = vpop.f32.mrb[0].mxu0
      %v809 = vpop.f32.mrb[0].mxu0
      %v810 = vadd.f32 %v325, %v809
      %v811 = vpop.f32.mrb[0].mxu0
      %812 = vmatprep.mubr.bf16.mxu0 %v509
      %813 = vmatmul.mubr.bf16.gmra.mrb[0].mxu0 %v508
      %v814 = vpop.f32.mrb[0].mxu0
      %v815 = vadd.f32 %v325, %v814
      %v816 = vpop.f32.mrb[0].mxu0
      %v817 = vpop.f32.mrb[0].mxu0
      %v818 = vadd.f32 %v325, %v817
      %v819 = vpop.f32.mrb[0].mxu0
      %820 = vmatprep.mubr.bf16.mxu0 %v512
      %821 = vmatmul.mubr.bf16.gmra.mrb[0].mxu0 %v511
      %v822 = vpop.f32.mrb[0].mxu0
      %v823 = vadd.f32 %v325, %v822
      %v824 = vpop.f32.mrb[0].mxu0
      %v825 = vpop.f32.mrb[0].mxu0
      %v826 = vadd.f32 %v325, %v825
      %v827 = vpop.f32.mrb[0].mxu0
      %828 = vmatprep.mubr.bf16.mxu0 %v515
      %829 = vmatmul.mubr.bf16.gmra.mrb[0].mxu0 %v514
      %v830 = vpop.f32.mrb[0].mxu0
      %v831 = vadd.f32 %v325, %v830
      %v832 = vpop.f32.mrb[0].mxu0
      %v833 = vpop.f32.mrb[0].mxu0
      %v834 = vadd.f32 %v325, %v833
      %v835 = vpop.f32.mrb[0].mxu0
      %836 = vmatprep.mubr.bf16.mxu0 %v518
      %837 = vmatmul.mubr.bf16.gmra.mrb[0].mxu0 %v517
      %v838 = vpop.f32.mrb[0].mxu0
      %v839 = vadd.f32 %v325, %v838
      %v840 = vpop.f32.mrb[0].mxu0
      %v841 = vpop.f32.mrb[0].mxu0
      %v842 = vadd.f32 %v325, %v841
      %v843 = vpop.f32.mrb[0].mxu0
      %844 = vmatprep.mubr.bf16.mxu0 %v521
      %845 = vmatmul.mubr.bf16.gmra.mrb[0].mxu0 %v520
      %v846 = vpop.f32.mrb[0].mxu0
      %v847 = vadd.f32 %v325, %v846
      %v848 = vpop.f32.mrb[0].mxu0
      %v849 = vpop.f32.mrb[0].mxu0
      %v850 = vadd.f32 %v325, %v849
      %v851 = vpop.f32.mrb[0].mxu0
      %852 = vmatprep.mubr.bf16.mxu0 %v524
      %853 = vmatmul.mubr.bf16.gmra.mrb[0].mxu0 %v523
      %v854 = vpop.f32.mrb[0].mxu0
      %v855 = vadd.f32 %v325, %v854
      %v856 = vpop.f32.mrb[0].mxu0
      %v857 = vpop.f32.mrb[0].mxu0
      %v858 = vadd.f32 %v325, %v857
      %v859 = vpop.f32.mrb[0].mxu0
      %860 = vmatprep.mubr.bf16.mxu0 %v527
      %861 = vmatmul.mubr.bf16.gmra.mrb[0].mxu0 %v526
      %v862 = vpop.f32.mrb[0].mxu0
      %v863 = vadd.f32 %v325, %v862
      %v864 = vpop.f32.mrb[0].mxu0
      %v865 = vpop.f32.mrb[0].mxu0
      %v866 = vadd.f32 %v325, %v865
      %v867 = vpop.f32.mrb[0].mxu0
      %868 = vmatprep.mubr.bf16.mxu0 %v530
      %869 = vmatmul.mubr.bf16.gmra.mrb[0].mxu0 %v529
      %v870 = vpop.f32.mrb[0].mxu0
      %v871 = vadd.f32 %v325, %v870
      %v872 = vpop.f32.mrb[0].mxu0
      %v873 = vpop.f32.mrb[0].mxu0
      %v874 = vadd.f32 %v325, %v873
      %v875 = vpop.f32.mrb[0].mxu0
      %876 = vmatprep.mubr.bf16.mxu0 %v533
      %877 = vmatmul.mubr.bf16.gmra.mrb[0].mxu0 %v532
      %v878 = vpop.f32.mrb[0].mxu0
      %v879 = vadd.f32 %v325, %v878
      %v880 = vpop.f32.mrb[0].mxu0
      %v881 = vpop.f32.mrb[0].mxu0
      %v882 = vadd.f32 %v325, %v881
      %v883 = vpop.f32.mrb[0].mxu0
      %884 = vdwg.mxu0
      %885 = vmatprep.subr.bf16.mxu0 0
      %886 = vmatpush1.bf16.msra.mxu0 %v655
      %887 = vmatprep.subr.bf16.mxu0 0
      %888 = vmatpush1.bf16.msra.mxu0 %v656
      %889 = vmatprep.subr.bf16.mxu0 0
      %890 = vmatpush1.bf16.msra.mxu0 0
      %891 = vmatprep.subr.bf16.mxu0 0
      %892 = vmatpush1.bf16.msra.mxu0 0
      %893 = vmatprep.subr.bf16.mxu0 0
      %894 = vmatpush1.bf16.msra.mxu0 0
      %895 = vmatprep.subr.bf16.mxu0 0
      %896 = vmatpush1.bf16.msra.mxu0 0
      %897 = vmatprep.subr.bf16.mxu0 0
      %898 = vmatpush1.bf16.msra.mxu0 0
      %899 = vmatprep.subr.bf16.mxu0 0
      %900 = vmatpush1.bf16.msra.mxu0 0
      %901 = vmatprep.subr.bf16.mxu0 0
      %902 = vmatpush1.bf16.msra.mxu0 0
      %903 = vmatprep.subr.bf16.mxu0 0
      %904 = vmatpush1.bf16.msra.mxu0 0
      %905 = vmatprep.subr.bf16.mxu0 0
      %906 = vmatpush1.bf16.msra.mxu0 0
      %907 = vmatprep.subr.bf16.mxu0 0
      %908 = vmatpush1.bf16.msra.mxu0 0
      %909 = vmatprep.subr.bf16.mxu0 0
      %910 = vmatpush1.bf16.msra.mxu0 0
      %911 = vmatprep.subr.bf16.mxu0 0
      %912 = vmatpush1.bf16.msra.mxu0 0
      %913 = vmatprep.subr.bf16.mxu0 0
      %914 = vmatpush1.bf16.msra.mxu0 0
      %915 = vmatprep.subr.bf16.mxu0 0
      %916 = vmatpush1.bf16.msra.mxu0 0
      %917 = vmatprep.mubr.bf16.mxu0 0
      %918 = vmatmul.mubr.bf16.gmra.mrb[0].mxu0 %v677
      %v919 = vpop.f32.mrb[0].mxu0
      %v920 = vadd.f32 %v759, %v919
      %v921 = vpop.f32.mrb[0].mxu0
      %v922 = vpop.f32.mrb[0].mxu0
      %v923 = vadd.f32 %v762, %v922
      %v924 = vpop.f32.mrb[0].mxu0
      %925 = vmatprep.mubr.bf16.mxu0 0
      %926 = vmatmul.mubr.bf16.gmra.mrb[0].mxu0 %v680
      %v927 = vpop.f32.mrb[0].mxu0
      %v928 = vadd.f32 %v767, %v927
      %v929 = vpop.f32.mrb[0].mxu0
      %v930 = vpop.f32.mrb[0].mxu0
      %v931 = vadd.f32 %v770, %v930
      %v932 = vpop.f32.mrb[0].mxu0
      %933 = vmatprep.mubr.bf16.mxu0 0
      %934 = vmatmul.mubr.bf16.gmra.mrb[0].mxu0 %v683
      %v935 = vpop.f32.mrb[0].mxu0
      %v936 = vadd.f32 %v775, %v935
      %v937 = vpop.f32.mrb[0].mxu0
      %v938 = vpop.f32.mrb[0].mxu0
      %v939 = vadd.f32 %v778, %v938
      %v940 = vpop.f32.mrb[0].mxu0
      %941 = vmatprep.mubr.bf16.mxu0 0
      %942 = vmatmul.mubr.bf16.gmra.mrb[0].mxu0 %v686
      %v943 = vpop.f32.mrb[0].mxu0
      %v944 = vadd.f32 %v783, %v943
      %v945 = vpop.f32.mrb[0].mxu0
      %v946 = vpop.f32.mrb[0].mxu0
      %v947 = vadd.f32 %v786, %v946
      %v948 = vpop.f32.mrb[0].mxu0
      %949 = vmatprep.mubr.bf16.mxu0 0
      %950 = vmatmul.mubr.bf16.gmra.mrb[0].mxu0 %v689
      %v951 = vpop.f32.mrb[0].mxu0
      %v952 = vadd.f32 %v791, %v951
      %v953 = vpop.f32.mrb[0].mxu0
      %v954 = vpop.f32.mrb[0].mxu0
      %v955 = vadd.f32 %v794, %v954
      %v956 = vpop.f32.mrb[0].mxu0
      %957 = vmatprep.mubr.bf16.mxu0 0
      %958 = vmatmul.mubr.bf16.gmra.mrb[0].mxu0 %v692
      %v959 = vpop.f32.mrb[0].mxu0
      %v960 = vadd.f32 %v799, %v959
      %v961 = vpop.f32.mrb[0].mxu0
      %v962 = vpop.f32.mrb[0].mxu0
      %v963 = vadd.f32 %v802, %v962
      %v964 = vpop.f32.mrb[0].mxu0
      %965 = vmatprep.mubr.bf16.mxu0 0
      %966 = vmatmul.mubr.bf16.gmra.mrb[0].mxu0 %v695
      %v967 = vpop.f32.mrb[0].mxu0
      %v968 = vadd.f32 %v807, %v967
      %v969 = vpop.f32.mrb[0].mxu0
      %v970 = vpop.f32.mrb[0].mxu0
      %v971 = vadd.f32 %v810, %v970
      %v972 = vpop.f32.mrb[0].mxu0
      %973 = vmatprep.mubr.bf16.mxu0 0
      %974 = vmatmul.mubr.bf16.gmra.mrb[0].mxu0 %v698
      %v975 = vpop.f32.mrb[0].mxu0
      %v976 = vadd.f32 %v815, %v975
      %v977 = vpop.f32.mrb[0].mxu0
      %v978 = vpop.f32.mrb[0].mxu0
      %v979 = vadd.f32 %v818, %v978
      %v980 = vpop.f32.mrb[0].mxu0
      %981 = vmatprep.mubr.bf16.mxu0 0
      %982 = vmatmul.mubr.bf16.gmra.mrb[0].mxu0 %v701
      %v983 = vpop.f32.mrb[0].mxu0
      %v984 = vadd.f32 %v823, %v983
      %v985 = vpop.f32.mrb[0].mxu0
      %v986 = vpop.f32.mrb[0].mxu0
      %v987 = vadd.f32 %v826, %v986
      %v988 = vpop.f32.mrb[0].mxu0
      %989 = vmatprep.mubr.bf16.mxu0 0
      %990 = vmatmul.mubr.bf16.gmra.mrb[0].mxu0 %v704
      %v991 = vpop.f32.mrb[0].mxu0
      %v992 = vadd.f32 %v831, %v991
      %v993 = vpop.f32.mrb[0].mxu0
      %v994 = vpop.f32.mrb[0].mxu0
      %v995 = vadd.f32 %v834, %v994
      %v996 = vpop.f32.mrb[0].mxu0
      %997 = vmatprep.mubr.bf16.mxu0 0
      %998 = vmatmul.mubr.bf16.gmra.mrb[0].mxu0 %v707
      %v999 = vpop.f32.mrb[0].mxu0
      %v1000 = vadd.f32 %v839, %v999
      %v1001 = vpop.f32.mrb[0].mxu0
      %v1002 = vpop.f32.mrb[0].mxu0
      %v1003 = vadd.f32 %v842, %v1002
      %v1004 = vpop.f32.mrb[0].mxu0
      %1005 = vmatprep.mubr.bf16.mxu0 0
      %1006 = vmatmul.mubr.bf16.gmra.mrb[0].mxu0 %v710
      %v1007 = vpop.f32.mrb[0].mxu0
      %v1008 = vadd.f32 %v847, %v1007
      %v1009 = vpop.f32.mrb[0].mxu0
      %v1010 = vpop.f32.mrb[0].mxu0
      %v1011 = vadd.f32 %v850, %v1010
      %v1012 = vpop.f32.mrb[0].mxu0
      %1013 = vmatprep.mubr.bf16.mxu0 0
      %1014 = vmatmul.mubr.bf16.gmra.mrb[0].mxu0 %v713
      %v1015 = vpop.f32.mrb[0].mxu0
      %v1016 = vadd.f32 %v855, %v1015
      %v1017 = vpop.f32.mrb[0].mxu0
      %v1018 = vpop.f32.mrb[0].mxu0
      %v1019 = vadd.f32 %v858, %v1018
      %v1020 = vpop.f32.mrb[0].mxu0
      %1021 = vmatprep.mubr.bf16.mxu0 0
      %1022 = vmatmul.mubr.bf16.gmra.mrb[0].mxu0 %v716
      %v1023 = vpop.f32.mrb[0].mxu0
      %v1024 = vadd.f32 %v863, %v1023
      %v1025 = vpop.f32.mrb[0].mxu0
      %v1026 = vpop.f32.mrb[0].mxu0
      %v1027 = vadd.f32 %v866, %v1026
      %v1028 = vpop.f32.mrb[0].mxu0
      %1029 = vmatprep.mubr.bf16.mxu0 0
      %1030 = vmatmul.mubr.bf16.gmra.mrb[0].mxu0 %v719
      %v1031 = vpop.f32.mrb[0].mxu0
      %v1032 = vadd.f32 %v871, %v1031
      %v1033 = vpop.f32.mrb[0].mxu0
      %v1034 = vpop.f32.mrb[0].mxu0
      %v1035 = vadd.f32 %v874, %v1034
      %v1036 = vpop.f32.mrb[0].mxu0
      %1037 = vmatprep.mubr.bf16.mxu0 0
      %1038 = vmatmul.mubr.bf16.gmra.mrb[0].mxu0 %v722
      %v1039 = vpop.f32.mrb[0].mxu0
      %v1040 = vadd.f32 %v879, %v1039
      %v1041 = vpop.f32.mrb[0].mxu0
      %v1042 = vpop.f32.mrb[0].mxu0
      %v1043 = vadd.f32 %v882, %v1042
      %v1044 = vpop.f32.mrb[0].mxu0
      %1045 = vdwg.mxu0
      %v1046 = vmax.f32 %v920, 0.0
      %v1047 = vmax.f32 %v923, 0.0
      %v1048 = vmax.f32 %v928, 0.0
      %v1049 = vmax.f32 %v931, 0.0
      %v1050 = vmax.f32 %v936, 0.0
      %v1051 = vmax.f32 %v939, 0.0
      %v1052 = vmax.f32 %v944, 0.0
      %v1053 = vmax.f32 %v947, 0.0
      %v1054 = vmax.f32 %v952, 0.0
      %v1055 = vmax.f32 %v955, 0.0
      %v1056 = vmax.f32 %v960, 0.0
      %v1057 = vmax.f32 %v963, 0.0
      %v1058 = vmax.f32 %v968, 0.0
      %v1059 = vmax.f32 %v971, 0.0
      %v1060 = vmax.f32 %v976, 0.0
      %v1061 = vmax.f32 %v979, 0.0
      %v1062 = vmax.f32 %v984, 0.0
      %v1063 = vmax.f32 %v987, 0.0
      %v1064 = vmax.f32 %v992, 0.0
      %v1065 = vmax.f32 %v995, 0.0
      %v1066 = vmax.f32 %v1000, 0.0
      %v1067 = vmax.f32 %v1003, 0.0
      %v1068 = vmax.f32 %v1008, 0.0
      %v1069 = vmax.f32 %v1011, 0.0
      %v1070 = vmax.f32 %v1016, 0.0
      %v1071 = vmax.f32 %v1019, 0.0
      %v1072 = vmax.f32 %v1024, 0.0
      %v1073 = vmax.f32 %v1027, 0.0
      %v1074 = vmax.f32 %v1032, 0.0
      %v1075 = vmax.f32 %v1035, 0.0
      %v1076 = vmax.f32 %v1040, 0.0
      %v1077 = vmax.f32 %v1043, 0.0
      %1078 = vst.msk [vmem:[%s215] sm:$0xff] %vm675, %v1046
      %1079 = vst.msk [vmem:[%s215 + $0x8] sm:$0xff] %vm675, %v1047
      %1080 = vst.msk [vmem:[%s215 + $0x10] sm:$0xff] %vm675, %v1048
      %1081 = vst.msk [vmem:[%s215 + $0x18] sm:$0xff] %vm675, %v1049
      %1082 = vst.msk [vmem:[%s215 + $0x20] sm:$0xff] %vm675, %v1050
      %1083 = vst.msk [vmem:[%s215 + $0x28] sm:$0xff] %vm675, %v1051
      %1084 = vst.msk [vmem:[%s215 + $0x30] sm:$0xff] %vm675, %v1052
      %1085 = vst.msk [vmem:[%s215 + $0x38] sm:$0xff] %vm675, %v1053
      %1086 = vst.msk [vmem:[%s215 + $0x40] sm:$0xff] %vm675, %v1054
      %1087 = vst.msk [vmem:[%s215 + $0x48] sm:$0xff] %vm675, %v1055
      %1088 = vst.msk [vmem:[%s215 + $0x50] sm:$0xff] %vm675, %v1056
      %1089 = vst.msk [vmem:[%s215 + $0x58] sm:$0xff] %vm675, %v1057
      %1090 = vst.msk [vmem:[%s215 + $0x60] sm:$0xff] %vm675, %v1058
      %1091 = vst.msk [vmem:[%s215 + $0x68] sm:$0xff] %vm675, %v1059
      %1092 = vst.msk [vmem:[%s215 + $0x70] sm:$0xff] %vm675, %v1060
      %1093 = vst.msk [vmem:[%s215 + $0x78] sm:$0xff] %vm675, %v1061
      %1094 = vst.msk [vmem:[%s215 + $0x80] sm:$0xff] %vm675, %v1062
      %1095 = vst.msk [vmem:[%s215 + $0x88] sm:$0xff] %vm675, %v1063
      %1096 = vst.msk [vmem:[%s215 + $0x90] sm:$0xff] %vm675, %v1064
      %1097 = vst.msk [vmem:[%s215 + $0x98] sm:$0xff] %vm675, %v1065
      %1098 = vst.msk [vmem:[%s215 + $0xa0] sm:$0xff] %vm675, %v1066
      %1099 = vst.msk [vmem:[%s215 + $0xa8] sm:$0xff] %vm675, %v1067
      %1100 = vst.msk [vmem:[%s215 + $0xb0] sm:$0xff] %vm675, %v1068
      %1101 = vst.msk [vmem:[%s215 + $0xb8] sm:$0xff] %vm675, %v1069
      %1102 = vst.msk [vmem:[%s215 + $0xc0] sm:$0xff] %vm675, %v1070
      %1103 = vst.msk [vmem:[%s215 + $0xc8] sm:$0xff] %vm675, %v1071
      %1104 = vst.msk [vmem:[%s215 + $0xd0] sm:$0xff] %vm675, %v1072
      %1105 = vst.msk [vmem:[%s215 + $0xd8] sm:$0xff] %vm675, %v1073
      %1106 = vst.msk [vmem:[%s215 + $0xe0] sm:$0xff] %vm675, %v1074
      %1107 = vst.msk [vmem:[%s215 + $0xe8] sm:$0xff] %vm675, %v1075
      %1108 = vst.msk [vmem:[%s215 + $0xf0] sm:$0xff] %vm675, %v1076
      %1109 = vst.msk [vmem:[%s215 + $0xf8] sm:$0xff] %vm675, %v1077
      %s1110 = smul.u32 %s19, 2
      %s1111 = sadd.s32 %s1110, %s18
      %s1112 = smul.u32 32, %s1111
      %p1113 = scmp.lt.s32.totalorder %s1112, 191
      %s1114 = scalar_select %p1113, %s1112, 191
      %s1115 = smul.addr %s1114, 8
      %s1116 = scalar_lea.vmem %s3, %s1115
      // Predicated region
      $region33: #{device_forward.4} parent=31 // pred_check
        %p1117 = pneg %p121
      $region34: #{device_forward.4} parent=31 // pred_check_branch
        %1119 = sbr.rel (%p1117) target = $region36
      $region35: #{device_forward.4} parent=31 // pred_region
        %s1120 = smul.u32 %s19, 2
        %s1121 = sadd.s32 %s1120, %s18
        %s1122 = smul.u32 32, %s1121
      $region36: #{device_forward.4} parent=31 // pred_fallthru
        _
    $region32: #{device_forward.4} parent=5 // pred_fallthru
      _
    %p1123 = scmp.le.s32.totalorder 2, %s9
    // Predicated region
    $region37: #{device_forward.4} parent=5 // pred_check
      %p1124 = pneg %p1123
    $region38: #{device_forward.4} parent=5 // pred_check_branch
      %1126 = sbr.rel (%p1124) target = $region40
    $region39: #{device_forward.4} parent=5 // pred_region
      %s1127 = ssub.s32 %s9, 2
      // Predicated region
      $region41: #{device_forward.4} parent=39 // pred_check
        %p1128 = pneg %p127
      $region42: #{device_forward.4} parent=39 // pred_check_branch
        %1130 = sbr.rel (%p1128) target = $region44
      $region43: #{device_forward.4} parent=39 // pred_region
        %s1131 = smul.u32 %s21, 2
        %s1132 = sadd.s32 %s1131, %s20
        %s1133 = smul.u32 32, %s1132
        %p1134 = scmp.lt.s32.totalorder %s1133, 191
        %s1135 = scalar_select %p1134, %s1133, 191
        %s1136 = smul.addr %s1135, 8
        %s1137 = scalar_lea.vmem %s3, %s1136
      $region44: #{device_forward.4} parent=39 // pred_fallthru
        _
    $region40: #{device_forward.4} parent=5 // pred_fallthru
      _
  $region6: #{device_forward.4} parent=0 // loop_footer
    %s13 = sadd.s32 1, %s9
  $region7: #{device_forward.4} parent=0 // loop_footer_branch
    %8 = sbr.rel target = $region3
  $region8: #{device_forward.4} parent=0 // loop_exit
    _

// kernel: device_forward.5
$region0: #{device_forward.5}
  #allocation0 [shape = 'u32[]', space=smem, size = 0x4, offset = 0x4, fixed_abs, tag = 'smem constant byte address 0x4 - core index']
  #allocation1 [shape = 'u32[144,128]{1,0:T(1,128)}', space=vmem, size = 0x12000, scoped, tag = 'internal scratch']
  %s0 = inlined_call_operand.vmem [shape: bf16[1536,288], index: 0, kind: input, shape index: {}]
  %s1 = inlined_call_operand.vmem [shape: bf16[288,32], index: 1, kind: input, shape index: {}]
  %s2 = inlined_call_operand.vmem [shape: f32[1,32], index: 2, kind: input, shape index: {}]
  %s3 = inlined_call_operand.vmem [shape: bf16[32,128], index: 3, kind: input, shape index: {}]
  %s4 = inlined_call_operand.vmem [shape: f32[1,128], index: 4, kind: input, shape index: {}]
  %s5 = inlined_call_operand.vmem [shape: f32[1536,128], index: 5, kind: output, shape index: {}]
  %s6 = sld [smem:[#allocation0]]
  $region53: #{device_forward.5} parent=0
    _
  %s8 = ssub.s32 1, %s6
  %s9 = scalar_select 0, %s8, %s6
  loop: start=0, step=1, limit=8
  $region2: #{device_forward.5} parent=0 // loop_pre_header
    _
  $region3: #{device_forward.5} parent=0 // loop_header
    %s11 = sphi 0, %s15
    %p12 = scmp.ge.s32.totalorder %s11, 8
    %s21 = sphi 0, %s23
    %s24 = sphi 0, %s21
    %s25 = sphi 0, %s24
    %s41 = sphi 0, %s25
    %s45 = sphi 0, %s45
    %s47 = sphi 0, %s45
    %s48 = sphi 0, %s47
    %s62 = sphi 0, %s48
    %s66 = sphi 0, %s66
    %s68 = sphi 0, %s66
    %s69 = sphi 0, %s68
    %s83 = sphi 0, %s69
    %s87 = sphi 0, %s87
    %s89 = sphi 0, %s87
    %s90 = sphi 0, %s89
    %s104 = sphi 0, %s90
    %s108 = sphi 0, %s108
    %s110 = sphi 0, %s108
    %s111 = sphi 0, %s110
    %s125 = sphi 0, %s111
    %s131 = sphi 0, %s133
    %s134 = sphi 0, %s131
    %s135 = sphi 0, %s134
    %s151 = sphi 0, %s135
  $region4: #{device_forward.5} parent=0 // loop_header_branch
    %14 = sbr.rel (%p12) target = $region8
  $region5: #{device_forward.5} parent=0 // loop_body
    %s16 = ssub.s32 %s11, 1
    %s17 = ssub.s32 %s11, 2
    %s18 = sadd.s32 %s11, 1
    %s19 = ssub.s32 %s11, %s18
    %p20 = scmp.eq.s32.totalorder %s19, 0
    %s22 = sadd.s32 %s21, 1
    %s23 = scalar_select %p20, %s21, %s22
    %p26 = pneg %p20
    %p27 = scmp.eq.s32.totalorder %s11, 5
    %p28 = por %p26, %p27
    %p29 = scmp.ne.s32.totalorder %s21, %s24
    %p30 = scmp.eq.s32.totalorder %s11, 0
    %p31 = por %p29, %p30
    %p32 = scmp.ne.s32.totalorder %s21, %s24
    %p33 = scmp.eq.s32.totalorder %s16, 5
    %p34 = por %p32, %p33
    %p35 = scmp.ne.s32.totalorder %s24, %s25
    %p36 = scmp.eq.s32.totalorder %s16, 0
    %p37 = por %p35, %p36
    %p38 = scmp.ne.s32.totalorder %s24, %s25
    %p39 = scmp.eq.s32.totalorder %s17, 5
    %p40 = por %p38, %p39
    %p42 = scmp.ne.s32.totalorder %s25, %s41
    %p43 = scmp.eq.s32.totalorder %s17, 0
    %p44 = por %p42, %p43
    %s46 = sadd.s32 %s45, 1
    %p49 = scmp.eq.s32.totalorder %s11, 5
    %p50 = scmp.ne.s32.totalorder %s45, %s47
    %p51 = scmp.eq.s32.totalorder %s11, 0
    %p52 = por %p50, %p51
    %p53 = scmp.ne.s32.totalorder %s45, %s47
    %p54 = scmp.eq.s32.totalorder %s16, 5
    %p55 = por %p53, %p54
    %p56 = scmp.ne.s32.totalorder %s47, %s48
    %p57 = scmp.eq.s32.totalorder %s16, 0
    %p58 = por %p56, %p57
    %p59 = scmp.ne.s32.totalorder %s47, %s48
    %p60 = scmp.eq.s32.totalorder %s17, 5
    %p61 = por %p59, %p60
    %p63 = scmp.ne.s32.totalorder %s48, %s62
    %p64 = scmp.eq.s32.totalorder %s17, 0
    %p65 = por %p63, %p64
    %s67 = sadd.s32 %s66, 1
    %p70 = scmp.eq.s32.totalorder %s11, 5
    %p71 = scmp.ne.s32.totalorder %s66, %s68
    %p72 = scmp.eq.s32.totalorder %s11, 0
    %p73 = por %p71, %p72
    %p74 = scmp.ne.s32.totalorder %s66, %s68
    %p75 = scmp.eq.s32.totalorder %s16, 5
    %p76 = por %p74, %p75
    %p77 = scmp.ne.s32.totalorder %s68, %s69
    %p78 = scmp.eq.s32.totalorder %s16, 0
    %p79 = por %p77, %p78
    %p80 = scmp.ne.s32.totalorder %s68, %s69
    %p81 = scmp.eq.s32.totalorder %s17, 5
    %p82 = por %p80, %p81
    %p84 = scmp.ne.s32.totalorder %s69, %s83
    %p85 = scmp.eq.s32.totalorder %s17, 0
    %p86 = por %p84, %p85
    %s88 = sadd.s32 %s87, 1
    %p91 = scmp.eq.s32.totalorder %s11, 5
    %p92 = scmp.ne.s32.totalorder %s87, %s89
    %p93 = scmp.eq.s32.totalorder %s11, 0
    %p94 = por %p92, %p93
    %p95 = scmp.ne.s32.totalorder %s87, %s89
    %p96 = scmp.eq.s32.totalorder %s16, 5
    %p97 = por %p95, %p96
    %p98 = scmp.ne.s32.totalorder %s89, %s90
    %p99 = scmp.eq.s32.totalorder %s16, 0
    %p100 = por %p98, %p99
    %p101 = scmp.ne.s32.totalorder %s89, %s90
    %p102 = scmp.eq.s32.totalorder %s17, 5
    %p103 = por %p101, %p102
    %p105 = scmp.ne.s32.totalorder %s90, %s104
    %p106 = scmp.eq.s32.totalorder %s17, 0
    %p107 = por %p105, %p106
    %s109 = sadd.s32 %s108, 1
    %p112 = scmp.eq.s32.totalorder %s11, 5
    %p113 = scmp.ne.s32.totalorder %s108, %s110
    %p114 = scmp.eq.s32.totalorder %s11, 0
    %p115 = por %p113, %p114
    %p116 = scmp.ne.s32.totalorder %s108, %s110
    %p117 = scmp.eq.s32.totalorder %s16, 5
    %p118 = por %p116, %p117
    %p119 = scmp.ne.s32.totalorder %s110, %s111
    %p120 = scmp.eq.s32.totalorder %s16, 0
    %p121 = por %p119, %p120
    %p122 = scmp.ne.s32.totalorder %s110, %s111
    %p123 = scmp.eq.s32.totalorder %s17, 5
    %p124 = por %p122, %p123
    %p126 = scmp.ne.s32.totalorder %s111, %s125
    %p127 = scmp.eq.s32.totalorder %s17, 0
    %p128 = por %p126, %p127
    %s129 = ssub.s32 %s11, %s18
    %p130 = scmp.eq.s32.totalorder %s129, 0
    %s132 = sadd.s32 %s131, 1
    %s133 = scalar_select %p130, %s131, %s132
    %p136 = pneg %p130
    %p137 = scmp.eq.s32.totalorder %s11, 5
    %p138 = por %p136, %p137
    %p139 = scmp.ne.s32.totalorder %s131, %s134
    %p140 = scmp.eq.s32.totalorder %s11, 0
    %p141 = por %p139, %p140
    %p142 = scmp.ne.s32.totalorder %s131, %s134
    %p143 = scmp.eq.s32.totalorder %s16, 5
    %p144 = por %p142, %p143
    %p145 = scmp.ne.s32.totalorder %s134, %s135
    %p146 = scmp.eq.s32.totalorder %s16, 0
    %p147 = por %p145, %p146
    %p148 = scmp.ne.s32.totalorder %s134, %s135
    %p149 = scmp.eq.s32.totalorder %s17, 5
    %p150 = por %p148, %p149
    %p152 = scmp.ne.s32.totalorder %s135, %s151
    %p153 = scmp.eq.s32.totalorder %s17, 0
    %p154 = por %p152, %p153
    %p155 = scmp.le.s32.totalorder 1, %s11
    %p156 = scmp.lt.s32.totalorder %s11, 7
    %p157 = pnand %p155, %p156
    %p158 = pneg %p157
    // Predicated region
    $region9: #{device_forward.5} parent=5 // pred_check
      _
    $region10: #{device_forward.5} parent=5 // pred_check_branch
      %160 = sbr.rel (%p157) target = $region12
    $region11: #{device_forward.5} parent=5 // pred_region
      %s161 = ssub.s32 %s11, 1
      // Predicated region
      $region13: #{device_forward.5} parent=11 // pred_check
        %p162 = pneg %p58
      $region14: #{device_forward.5} parent=11 // pred_check_branch
        %164 = sbr.rel (%p162) target = $region16
      $region15: #{device_forward.5} parent=11 // pred_region
        _
      $region16: #{device_forward.5} parent=11 // pred_fallthru
        _
      // Predicated region
      $region17: #{device_forward.5} parent=11 // pred_check
        %p165 = pneg %p79
      $region18: #{device_forward.5} parent=11 // pred_check_branch
        %167 = sbr.rel (%p165) target = $region20
      $region19: #{device_forward.5} parent=11 // pred_region
        _
      $region20: #{device_forward.5} parent=11 // pred_fallthru
        _
      // Predicated region
      $region21: #{device_forward.5} parent=11 // pred_check
        %p168 = pneg %p100
      $region22: #{device_forward.5} parent=11 // pred_check_branch
        %170 = sbr.rel (%p168) target = $region24
      $region23: #{device_forward.5} parent=11 // pred_region
        _
      $region24: #{device_forward.5} parent=11 // pred_fallthru
        _
      // Predicated region
      $region25: #{device_forward.5} parent=11 // pred_check
        %p171 = pneg %p121
      $region26: #{device_forward.5} parent=11 // pred_check_branch
        %173 = sbr.rel (%p171) target = $region28
      $region27: #{device_forward.5} parent=11 // pred_region
        _
      $region28: #{device_forward.5} parent=11 // pred_fallthru
        _
    $region12: #{device_forward.5} parent=5 // pred_fallthru
      _
    %p174 = scmp.lt.s32.totalorder %s11, 6
    // Predicated region
    $region29: #{device_forward.5} parent=5 // pred_check
      %p175 = pneg %p174
    $region30: #{device_forward.5} parent=5 // pred_check_branch
      %177 = sbr.rel (%p175) target = $region32
    $region31: #{device_forward.5} parent=5 // pred_region
      // Predicated region
      $region33: #{device_forward.5} parent=31 // pred_check
        %p178 = pneg %p31
      $region34: #{device_forward.5} parent=31 // pred_check_branch
        %180 = sbr.rel (%p178) target = $region36
      $region35: #{device_forward.5} parent=31 // pred_region
        %s181 = smul.u32 32, %s11
        %p182 = scmp.lt.s32.totalorder %s181, 191
        %s183 = scalar_select %p182, %s181, 191
        %s184 = smul.addr %s183, 3
        %s185 = smul.addr %s184, 4
        %s186 = scalar_lea.vmem %s0, %s185
        %s187 = smul.u32 32, %s11
      $region36: #{device_forward.5} parent=31 // pred_fallthru
        _
    $region32: #{device_forward.5} parent=5 // pred_fallthru
      _
    %p188 = scmp.le.s32.totalorder 1, %s11
    %p189 = scmp.lt.s32.totalorder %s11, 7
    %p190 = pnand %p188, %p189
    %p191 = pneg %p190
    // Predicated region
    $region37: #{device_forward.5} parent=5 // pred_check
      _
    $region38: #{device_forward.5} parent=5 // pred_check_branch
      %193 = sbr.rel (%p190) target = $region40
    $region39: #{device_forward.5} parent=5 // pred_region
      %s194 = ssub.s32 %s11, 1
      %s195 = smul.u32 32, %s16
      %p196 = scmp.lt.s32.totalorder %s195, 191
      %s197 = scalar_select %p196, %s195, 191
      %s198 = smul.addr %s197, 3
      %s199 = smul.addr %s198, 4
      %s200 = scalar_lea.vmem %s0, %s199
      %p201 = pneg %p37
      %p202 = pneg %p34
      %p203 = pneg %p58
      %p204 = pneg %p55
      %p205 = pneg %p79
      %p206 = pneg %p76
      %p207 = pneg %p100
      %p208 = pneg %p97
      %p209 = pneg %p121
      %p210 = pneg %p118
      %p211 = pneg %p147
      %p212 = pneg %p144
      %s213 = smul.u32 32, %s16
      %p214 = scmp.lt.s32.totalorder %s213, 191
      %s215 = scalar_select %p214, %s213, 191
      %s216 = smul.addr %s215, 8
      %s217 = scalar_lea.vmem %s5, %s216
      %s218 = smul.u32 32, %s16
      %p219 = scmp.lt.s32.totalorder %s218, 191
      %s220 = scalar_select %p219, %s218, 191
      %s221 = smul.addr %s220, 3
      %s222 = smul.addr %s221, 4
      %s223 = scalar_lea.vmem %s0, %s222
      %s224 = smul.u32 32, %s16
      %s225 = smul.u32 32, %s16
      %p226 = scmp.lt.s32.totalorder %s225, 191
      %s227 = scalar_select %p226, %s225, 191
      %s228 = smul.addr %s227, 8
      %s229 = scalar_lea.vmem %s5, %s228
      %s230 = smul.u32 32, %s16
      %v232 = vld [vmem:[%s223] sm:$0xff]
      %v233 = vld [vmem:[%s223 + $0x8] sm:$0xf]
      %v234 = vld [vmem:[%s223 + $0xc] sm:$0xff]
      %v235 = vld [vmem:[%s223 + $0x14] sm:$0xf]
      %v236 = vld [vmem:[%s223 + $0x18] sm:$0xff]
      %v237 = vld [vmem:[%s223 + $0x20] sm:$0xf]
      %v238 = vld [vmem:[%s223 + $0x24] sm:$0xff]
      %v239 = vld [vmem:[%s223 + $0x2c] sm:$0xf]
      %v240 = vld [vmem:[%s223 + $0x30] sm:$0xff]
      %v241 = vld [vmem:[%s223 + $0x38] sm:$0xf]
      %v242 = vld [vmem:[%s223 + $0x3c] sm:$0xff]
      %v243 = vld [vmem:[%s223 + $0x44] sm:$0xf]
      %v244 = vld [vmem:[%s223 + $0x48] sm:$0xff]
      %v245 = vld [vmem:[%s223 + $0x50] sm:$0xf]
      %v246 = vld [vmem:[%s223 + $0x54] sm:$0xff]
      %v247 = vld [vmem:[%s223 + $0x5c] sm:$0xf]
      %v248 = vld [vmem:[%s223 + $0x60] sm:$0xff]
      %v249 = vld [vmem:[%s223 + $0x68] sm:$0xf]
      %v250 = vld [vmem:[%s223 + $0x6c] sm:$0xff]
      %v251 = vld [vmem:[%s223 + $0x74] sm:$0xf]
      %v252 = vld [vmem:[%s223 + $0x78] sm:$0xff]
      %v253 = vld [vmem:[%s223 + $0x80] sm:$0xf]
      %v254 = vld [vmem:[%s223 + $0x84] sm:$0xff]
      %v255 = vld [vmem:[%s223 + $0x8c] sm:$0xf]
      %v256 = vld [vmem:[%s223 + $0x90] sm:$0xff]
      %v257 = vld [vmem:[%s223 + $0x98] sm:$0xf]
      %v258 = vld [vmem:[%s223 + $0x9c] sm:$0xff]
      %v259 = vld [vmem:[%s223 + $0xa4] sm:$0xf]
      %v260 = vld [vmem:[%s223 + $0xa8] sm:$0xff]
      %v261 = vld [vmem:[%s223 + $0xb0] sm:$0xf]
      %v262 = vld [vmem:[%s223 + $0xb4] sm:$0xff]
      %v263 = vld [vmem:[%s223 + $0xbc] sm:$0xf]
      %v264 = vld [vmem:[%s223 + $0xc0] sm:$0xff]
      %v265 = vld [vmem:[%s223 + $0xc8] sm:$0xf]
      %v266 = vld [vmem:[%s223 + $0xcc] sm:$0xff]
      %v267 = vld [vmem:[%s223 + $0xd4] sm:$0xf]
      %v268 = vld [vmem:[%s223 + $0xd8] sm:$0xff]
      %v269 = vld [vmem:[%s223 + $0xe0] sm:$0xf]
      %v270 = vld [vmem:[%s223 + $0xe4] sm:$0xff]
      %v271 = vld [vmem:[%s223 + $0xec] sm:$0xf]
      %v272 = vld [vmem:[%s223 + $0xf0] sm:$0xff]
      %v273 = vld [vmem:[%s223 + $0xf8] sm:$0xf]
      %v274 = vld [vmem:[%s223 + $0xfc] sm:$0xff]
      %v275 = vld [vmem:[%s223 + $0x104] sm:$0xf]
      %v276 = vld [vmem:[%s223 + $0x108] sm:$0xff]
      %v277 = vld [vmem:[%s223 + $0x110] sm:$0xf]
      %v278 = vld [vmem:[%s223 + $0x114] sm:$0xff]
      %v279 = vld [vmem:[%s223 + $0x11c] sm:$0xf]
      %v280 = vld [vmem:[%s223 + $0x120] sm:$0xff]
      %v281 = vld [vmem:[%s223 + $0x128] sm:$0xf]
      %v282 = vld [vmem:[%s223 + $0x12c] sm:$0xff]
      %v283 = vld [vmem:[%s223 + $0x134] sm:$0xf]
      %v284 = vld [vmem:[%s223 + $0x138] sm:$0xff]
      %v285 = vld [vmem:[%s223 + $0x140] sm:$0xf]
      %v286 = vld [vmem:[%s223 + $0x144] sm:$0xff]
      %v287 = vld [vmem:[%s223 + $0x14c] sm:$0xf]
      %v288 = vld [vmem:[%s223 + $0x150] sm:$0xff]
      %v289 = vld [vmem:[%s223 + $0x158] sm:$0xf]
      %v290 = vld [vmem:[%s223 + $0x15c] sm:$0xff]
      %v291 = vld [vmem:[%s223 + $0x164] sm:$0xf]
      %v292 = vld [vmem:[%s223 + $0x168] sm:$0xff]
      %v293 = vld [vmem:[%s223 + $0x170] sm:$0xf]
      %v294 = vld [vmem:[%s223 + $0x174] sm:$0xff]
      %v295 = vld [vmem:[%s223 + $0x17c] sm:$0xf]
      %v296 = vld [vmem:[%s1] sm:$0xf]
      %v297 = vld [vmem:[%s1 + $0x4] sm:$0xf]
      %v298 = vld [vmem:[%s1 + $0x8] sm:$0xf]
      %v299 = vld [vmem:[%s1 + $0xc] sm:$0xf]
      %v300 = vld [vmem:[%s1 + $0x10] sm:$0xf]
      %v301 = vld [vmem:[%s1 + $0x14] sm:$0xf]
      %v302 = vld [vmem:[%s1 + $0x18] sm:$0xf]
      %v303 = vld [vmem:[%s1 + $0x1c] sm:$0xf]
      %v304 = vld [vmem:[%s1 + $0x20] sm:$0xf]
      %v305 = vld [vmem:[%s1 + $0x24] sm:$0xf]
      %v306 = vld [vmem:[%s1 + $0x28] sm:$0xf]
      %v307 = vld [vmem:[%s1 + $0x2c] sm:$0xf]
      %v308 = vld [vmem:[%s1 + $0x30] sm:$0xf]
      %v309 = vld [vmem:[%s1 + $0x34] sm:$0xf]
      %v310 = vld [vmem:[%s1 + $0x38] sm:$0xf]
      %v311 = vld [vmem:[%s1 + $0x3c] sm:$0xf]
      %v312 = vld [vmem:[%s1 + $0x40] sm:$0xf]
      %v313 = vld [vmem:[%s1 + $0x44] sm:$0xf]
      %v314 = vld [vmem:[%s1 + $0x48] sm:$0xf]
      %v315 = vld [vmem:[%s1 + $0x4c] sm:$0xf]
      %v316 = vld [vmem:[%s1 + $0x50] sm:$0xf]
      %v317 = vld [vmem:[%s1 + $0x54] sm:$0xf]
      %v318 = vld [vmem:[%s1 + $0x58] sm:$0xf]
      %v319 = vld [vmem:[%s1 + $0x5c] sm:$0xf]
      %v320 = vld [vmem:[%s1 + $0x60] sm:$0xf]
      %v321 = vld [vmem:[%s1 + $0x64] sm:$0xf]
      %v322 = vld [vmem:[%s1 + $0x68] sm:$0xf]
      %v323 = vld [vmem:[%s1 + $0x6c] sm:$0xf]
      %v324 = vld [vmem:[%s1 + $0x70] sm:$0xf]
      %v325 = vld [vmem:[%s1 + $0x74] sm:$0xf]
      %v326 = vld [vmem:[%s1 + $0x78] sm:$0xf]
      %v327 = vld [vmem:[%s1 + $0x7c] sm:$0xf]
      %v328 = vld [vmem:[%s1 + $0x80] sm:$0xf]
      %v329 = vld [vmem:[%s1 + $0x84] sm:$0xf]
      %v330 = vld [vmem:[%s1 + $0x88] sm:$0xf]
      %v331 = vld [vmem:[%s1 + $0x8c] sm:$0xf]
      %v332 = vld [vmem:[%s2] sm:$0x1]
      %v334 = vlaneseq
      %v335 = vshrl.u32 %v334, 7
      %v336 = vsub.s32 0, %v335
      %v337 = vrot.slane %v332, %v336
      %v403 = vunpack.c.l.b16 %v232
      %v404 = vunpack.c.h.b16 %v232
      %v405 = vunpack.c.l.b16 %v233
      %v406 = vunpack.c.l.b16 %v234
      %v407 = vunpack.c.h.b16 %v234
      %v408 = vunpack.c.l.b16 %v235
      %v409 = vunpack.c.l.b16 %v236
      %v410 = vunpack.c.h.b16 %v236
      %v411 = vunpack.c.l.b16 %v237
      %v412 = vunpack.c.l.b16 %v238
      %v413 = vunpack.c.h.b16 %v238
      %v414 = vunpack.c.l.b16 %v239
      %v415 = vunpack.c.l.b16 %v240
      %v416 = vunpack.c.h.b16 %v240
      %v417 = vunpack.c.l.b16 %v241
      %v418 = vunpack.c.l.b16 %v242
      %v419 = vunpack.c.h.b16 %v242
      %v420 = vunpack.c.l.b16 %v243
      %v421 = vunpack.c.l.b16 %v244
      %v422 = vunpack.c.h.b16 %v244
      %v423 = vunpack.c.l.b16 %v245
      %v424 = vunpack.c.l.b16 %v246
      %v425 = vunpack.c.h.b16 %v246
      %v426 = vunpack.c.l.b16 %v247
      %v427 = vunpack.c.l.b16 %v248
      %v428 = vunpack.c.h.b16 %v248
      %v429 = vunpack.c.l.b16 %v249
      %v430 = vunpack.c.l.b16 %v250
      %v431 = vunpack.c.h.b16 %v250
      %v432 = vunpack.c.l.b16 %v251
      %v433 = vunpack.c.l.b16 %v252
      %v434 = vunpack.c.h.b16 %v252
      %v435 = vunpack.c.l.b16 %v253
      %v436 = vunpack.c.l.b16 %v254
      %v437 = vunpack.c.h.b16 %v254
      %v438 = vunpack.c.l.b16 %v255
      %v439 = vunpack.c.l.b16 %v256
      %v440 = vunpack.c.h.b16 %v256
      %v441 = vunpack.c.l.b16 %v257
      %v442 = vunpack.c.l.b16 %v258
      %v443 = vunpack.c.h.b16 %v258
      %v444 = vunpack.c.l.b16 %v259
      %v445 = vunpack.c.l.b16 %v260
      %v446 = vunpack.c.h.b16 %v260
      %v447 = vunpack.c.l.b16 %v261
      %v448 = vunpack.c.l.b16 %v262
      %v449 = vunpack.c.h.b16 %v262
      %v450 = vunpack.c.l.b16 %v263
      %v451 = vunpack.c.l.b16 %v264
      %v452 = vunpack.c.h.b16 %v264
      %v453 = vunpack.c.l.b16 %v265
      %v454 = vunpack.c.l.b16 %v266
      %v455 = vunpack.c.h.b16 %v266
      %v456 = vunpack.c.l.b16 %v267
      %v457 = vunpack.c.l.b16 %v268
      %v458 = vunpack.c.h.b16 %v268
      %v459 = vunpack.c.l.b16 %v269
      %v460 = vunpack.c.l.b16 %v270
      %v461 = vunpack.c.h.b16 %v270
      %v462 = vunpack.c.l.b16 %v271
      %v463 = vunpack.c.l.b16 %v272
      %v464 = vunpack.c.h.b16 %v272
      %v465 = vunpack.c.l.b16 %v273
      %v466 = vunpack.c.l.b16 %v274
      %v467 = vunpack.c.h.b16 %v274
      %v468 = vunpack.c.l.b16 %v275
      %v469 = vunpack.c.l.b16 %v276
      %v470 = vunpack.c.h.b16 %v276
      %v471 = vunpack.c.l.b16 %v277
      %v472 = vunpack.c.l.b16 %v278
      %v473 = vunpack.c.h.b16 %v278
      %v474 = vunpack.c.l.b16 %v279
      %v475 = vunpack.c.l.b16 %v280
      %v476 = vunpack.c.h.b16 %v280
      %v477 = vunpack.c.l.b16 %v281
      %v478 = vunpack.c.l.b16 %v282
      %v479 = vunpack.c.h.b16 %v282
      %v480 = vunpack.c.l.b16 %v283
      %v481 = vunpack.c.l.b16 %v284
      %v482 = vunpack.c.h.b16 %v284
      %v483 = vunpack.c.l.b16 %v285
      %v484 = vunpack.c.l.b16 %v286
      %v485 = vunpack.c.h.b16 %v286
      %v486 = vunpack.c.l.b16 %v287
      %v487 = vunpack.c.l.b16 %v288
      %v488 = vunpack.c.h.b16 %v288
      %v489 = vunpack.c.l.b16 %v289
      %v490 = vunpack.c.l.b16 %v290
      %v491 = vunpack.c.h.b16 %v290
      %v492 = vunpack.c.l.b16 %v291
      %v493 = vunpack.c.l.b16 %v292
      %v494 = vunpack.c.h.b16 %v292
      %v495 = vunpack.c.l.b16 %v293
      %v496 = vunpack.c.l.b16 %v294
      %v497 = vunpack.c.h.b16 %v294
      %v498 = vunpack.c.l.b16 %v295
      %v499 = vpack.c.b16 %v406, %v403
      %v500 = vpack.c.b16 %v407, %v404
      %v501 = vpack.c.b16 %v408, %v405
      %v502 = vpack.c.b16 %v412, %v409
      %v503 = vpack.c.b16 %v413, %v410
      %v504 = vpack.c.b16 %v414, %v411
      %v505 = vpack.c.b16 %v418, %v415
      %v506 = vpack.c.b16 %v419, %v416
      %v507 = vpack.c.b16 %v420, %v417
      %v508 = vpack.c.b16 %v424, %v421
      %v509 = vpack.c.b16 %v425, %v422
      %v510 = vpack.c.b16 %v426, %v423
      %v511 = vpack.c.b16 %v430, %v427
      %v512 = vpack.c.b16 %v431, %v428
      %v513 = vpack.c.b16 %v432, %v429
      %v514 = vpack.c.b16 %v436, %v433
      %v515 = vpack.c.b16 %v437, %v434
      %v516 = vpack.c.b16 %v438, %v435
      %v517 = vpack.c.b16 %v442, %v439
      %v518 = vpack.c.b16 %v443, %v440
      %v519 = vpack.c.b16 %v444, %v441
      %v520 = vpack.c.b16 %v448, %v445
      %v521 = vpack.c.b16 %v449, %v446
      %v522 = vpack.c.b16 %v450, %v447
      %v523 = vpack.c.b16 %v454, %v451
      %v524 = vpack.c.b16 %v455, %v452
      %v525 = vpack.c.b16 %v456, %v453
      %v526 = vpack.c.b16 %v460, %v457
      %v527 = vpack.c.b16 %v461, %v458
      %v528 = vpack.c.b16 %v462, %v459
      %v529 = vpack.c.b16 %v466, %v463
      %v530 = vpack.c.b16 %v467, %v464
      %v531 = vpack.c.b16 %v468, %v465
      %v532 = vpack.c.b16 %v472, %v469
      %v533 = vpack.c.b16 %v473, %v470
      %v534 = vpack.c.b16 %v474, %v471
      %v535 = vpack.c.b16 %v478, %v475
      %v536 = vpack.c.b16 %v479, %v476
      %v537 = vpack.c.b16 %v480, %v477
      %v538 = vpack.c.b16 %v484, %v481
      %v539 = vpack.c.b16 %v485, %v482
      %v540 = vpack.c.b16 %v486, %v483
      %v541 = vpack.c.b16 %v490, %v487
      %v542 = vpack.c.b16 %v491, %v488
      %v543 = vpack.c.b16 %v492, %v489
      %v544 = vpack.c.b16 %v496, %v493
      %v545 = vpack.c.b16 %v497, %v494
      %v546 = vpack.c.b16 %v498, %v495
      %v615 = vunpack.c.l.b16 %v296
      %v616 = vunpack.c.l.b16 %v297
      %v617 = vunpack.c.l.b16 %v298
      %v618 = vunpack.c.l.b16 %v299
      %v619 = vunpack.c.l.b16 %v300
      %v620 = vunpack.c.l.b16 %v301
      %v621 = vunpack.c.l.b16 %v302
      %v622 = vunpack.c.l.b16 %v303
      %v623 = vunpack.c.l.b16 %v304
      %v624 = vunpack.c.l.b16 %v305
      %v625 = vunpack.c.l.b16 %v306
      %v626 = vunpack.c.l.b16 %v307
      %v627 = vunpack.c.l.b16 %v308
      %v628 = vunpack.c.l.b16 %v309
      %v629 = vunpack.c.l.b16 %v310
      %v630 = vunpack.c.l.b16 %v311
      %v631 = vunpack.c.l.b16 %v312
      %v632 = vunpack.c.l.b16 %v313
      %v633 = vunpack.c.l.b16 %v314
      %v634 = vunpack.c.l.b16 %v315
      %v635 = vunpack.c.l.b16 %v316
      %v636 = vunpack.c.l.b16 %v317
      %v637 = vunpack.c.l.b16 %v318
      %v638 = vunpack.c.l.b16 %v319
      %v639 = vunpack.c.l.b16 %v320
      %v640 = vunpack.c.l.b16 %v321
      %v641 = vunpack.c.l.b16 %v322
      %v642 = vunpack.c.l.b16 %v323
      %v643 = vunpack.c.l.b16 %v324
      %v644 = vunpack.c.l.b16 %v325
      %v645 = vunpack.c.l.b16 %v326
      %v646 = vunpack.c.l.b16 %v327
      %v647 = vunpack.c.l.b16 %v328
      %v648 = vunpack.c.l.b16 %v329
      %v649 = vunpack.c.l.b16 %v330
      %v650 = vunpack.c.l.b16 %v331
      %v651 = vpack.c.b16 %v616, %v615
      %v652 = vpack.c.b16 %v618, %v617
      %v653 = vpack.c.b16 %v620, %v619
      %v654 = vpack.c.b16 %v622, %v621
      %v655 = vpack.c.b16 %v624, %v623
      %v656 = vpack.c.b16 %v626, %v625
      %v657 = vpack.c.b16 %v628, %v627
      %v658 = vpack.c.b16 %v630, %v629
      %v659 = vpack.c.b16 %v632, %v631
      %v660 = vpack.c.b16 %v634, %v633
      %v661 = vpack.c.b16 %v636, %v635
      %v662 = vpack.c.b16 %v638, %v637
      %v663 = vpack.c.b16 %v640, %v639
      %v664 = vpack.c.b16 %v642, %v641
      %v665 = vpack.c.b16 %v644, %v643
      %v666 = vpack.c.b16 %v646, %v645
      %v667 = vpack.c.b16 %v648, %v647
      %v668 = vpack.c.b16 %v650, %v649
      %vm687 = vcmask 261120
      %v689 = vsel %vm687, %v501, 0
      %v692 = vsel %vm687, %v504, 0
      %v695 = vsel %vm687, %v507, 0
      %v698 = vsel %vm687, %v510, 0
      %v701 = vsel %vm687, %v513, 0
      %v704 = vsel %vm687, %v516, 0
      %v707 = vsel %vm687, %v519, 0
      %v710 = vsel %vm687, %v522, 0
      %v713 = vsel %vm687, %v525, 0
      %v716 = vsel %vm687, %v528, 0
      %v719 = vsel %vm687, %v531, 0
      %v722 = vsel %vm687, %v534, 0
      %v725 = vsel %vm687, %v537, 0
      %v728 = vsel %vm687, %v540, 0
      %v731 = vsel %vm687, %v543, 0
      %v734 = vsel %vm687, %v546, 0
      %736 = vmatprep.subr.bf16.mxu0 0
      %737 = vmatpush1.bf16.msra.mxu0 %v651
      %738 = vmatprep.subr.bf16.mxu0 0
      %739 = vmatpush1.bf16.msra.mxu0 %v652
      %740 = vmatprep.subr.bf16.mxu0 0
      %741 = vmatpush1.bf16.msra.mxu0 %v653
      %742 = vmatprep.subr.bf16.mxu0 0
      %743 = vmatpush1.bf16.msra.mxu0 %v654
      %744 = vmatprep.subr.bf16.mxu0 0
      %745 = vmatpush1.bf16.msra.mxu0 %v655
      %746 = vmatprep.subr.bf16.mxu0 0
      %747 = vmatpush1.bf16.msra.mxu0 %v656
      %748 = vmatprep.subr.bf16.mxu0 0
      %749 = vmatpush1.bf16.msra.mxu0 %v657
      %750 = vmatprep.subr.bf16.mxu0 0
      %751 = vmatpush1.bf16.msra.mxu0 %v658
      %752 = vmatprep.subr.bf16.mxu0 0
      %753 = vmatpush1.bf16.msra.mxu0 %v659
      %754 = vmatprep.subr.bf16.mxu0 0
      %755 = vmatpush1.bf16.msra.mxu0 %v660
      %756 = vmatprep.subr.bf16.mxu0 0
      %757 = vmatpush1.bf16.msra.mxu0 %v661
      %758 = vmatprep.subr.bf16.mxu0 0
      %759 = vmatpush1.bf16.msra.mxu0 %v662
      %760 = vmatprep.subr.bf16.mxu0 0
      %761 = vmatpush1.bf16.msra.mxu0 %v663
      %762 = vmatprep.subr.bf16.mxu0 0
      %763 = vmatpush1.bf16.msra.mxu0 %v664
      %764 = vmatprep.subr.bf16.mxu0 0
      %765 = vmatpush1.bf16.msra.mxu0 %v665
      %766 = vmatprep.subr.bf16.mxu0 0
      %767 = vmatpush1.bf16.msra.mxu0 %v666
      %768 = vmatprep.mubr.bf16.mxu0 %v500
      %769 = vmatmul.mubr.bf16.gmra.mrb[0].mxu0 %v499
      %v770 = vpop.f32.mrb[0].mxu0
      %v771 = vadd.f32 %v337, %v770
      %v772 = vpop.f32.mrb[0].mxu0
      %v773 = vpop.f32.mrb[0].mxu0
      %v774 = vadd.f32 %v337, %v773
      %v775 = vpop.f32.mrb[0].mxu0
      %776 = vmatprep.mubr.bf16.mxu0 %v503
      %777 = vmatmul.mubr.bf16.gmra.mrb[0].mxu0 %v502
      %v778 = vpop.f32.mrb[0].mxu0
      %v779 = vadd.f32 %v337, %v778
      %v780 = vpop.f32.mrb[0].mxu0
      %v781 = vpop.f32.mrb[0].mxu0
      %v782 = vadd.f32 %v337, %v781
      %v783 = vpop.f32.mrb[0].mxu0
      %784 = vmatprep.mubr.bf16.mxu0 %v506
      %785 = vmatmul.mubr.bf16.gmra.mrb[0].mxu0 %v505
      %v786 = vpop.f32.mrb[0].mxu0
      %v787 = vadd.f32 %v337, %v786
      %v788 = vpop.f32.mrb[0].mxu0
      %v789 = vpop.f32.mrb[0].mxu0
      %v790 = vadd.f32 %v337, %v789
      %v791 = vpop.f32.mrb[0].mxu0
      %792 = vmatprep.mubr.bf16.mxu0 %v509
      %793 = vmatmul.mubr.bf16.gmra.mrb[0].mxu0 %v508
      %v794 = vpop.f32.mrb[0].mxu0
      %v795 = vadd.f32 %v337, %v794
      %v796 = vpop.f32.mrb[0].mxu0
      %v797 = vpop.f32.mrb[0].mxu0
      %v798 = vadd.f32 %v337, %v797
      %v799 = vpop.f32.mrb[0].mxu0
      %800 = vmatprep.mubr.bf16.mxu0 %v512
      %801 = vmatmul.mubr.bf16.gmra.mrb[0].mxu0 %v511
      %v802 = vpop.f32.mrb[0].mxu0
      %v803 = vadd.f32 %v337, %v802
      %v804 = vpop.f32.mrb[0].mxu0
      %v805 = vpop.f32.mrb[0].mxu0
      %v806 = vadd.f32 %v337, %v805
      %v807 = vpop.f32.mrb[0].mxu0
      %808 = vmatprep.mubr.bf16.mxu0 %v515
      %809 = vmatmul.mubr.bf16.gmra.mrb[0].mxu0 %v514
      %v810 = vpop.f32.mrb[0].mxu0
      %v811 = vadd.f32 %v337, %v810
      %v812 = vpop.f32.mrb[0].mxu0
      %v813 = vpop.f32.mrb[0].mxu0
      %v814 = vadd.f32 %v337, %v813
      %v815 = vpop.f32.mrb[0].mxu0
      %816 = vmatprep.mubr.bf16.mxu0 %v518
      %817 = vmatmul.mubr.bf16.gmra.mrb[0].mxu0 %v517
      %v818 = vpop.f32.mrb[0].mxu0
      %v819 = vadd.f32 %v337, %v818
      %v820 = vpop.f32.mrb[0].mxu0
      %v821 = vpop.f32.mrb[0].mxu0
      %v822 = vadd.f32 %v337, %v821
      %v823 = vpop.f32.mrb[0].mxu0
      %824 = vmatprep.mubr.bf16.mxu0 %v521
      %825 = vmatmul.mubr.bf16.gmra.mrb[0].mxu0 %v520
      %v826 = vpop.f32.mrb[0].mxu0
      %v827 = vadd.f32 %v337, %v826
      %v828 = vpop.f32.mrb[0].mxu0
      %v829 = vpop.f32.mrb[0].mxu0
      %v830 = vadd.f32 %v337, %v829
      %v831 = vpop.f32.mrb[0].mxu0
      %832 = vmatprep.mubr.bf16.mxu0 %v524
      %833 = vmatmul.mubr.bf16.gmra.mrb[0].mxu0 %v523
      %v834 = vpop.f32.mrb[0].mxu0
      %v835 = vadd.f32 %v337, %v834
      %v836 = vpop.f32.mrb[0].mxu0
      %v837 = vpop.f32.mrb[0].mxu0
      %v838 = vadd.f32 %v337, %v837
      %v839 = vpop.f32.mrb[0].mxu0
      %840 = vmatprep.mubr.bf16.mxu0 %v527
      %841 = vmatmul.mubr.bf16.gmra.mrb[0].mxu0 %v526
      %v842 = vpop.f32.mrb[0].mxu0
      %v843 = vadd.f32 %v337, %v842
      %v844 = vpop.f32.mrb[0].mxu0
      %v845 = vpop.f32.mrb[0].mxu0
      %v846 = vadd.f32 %v337, %v845
      %v847 = vpop.f32.mrb[0].mxu0
      %848 = vmatprep.mubr.bf16.mxu0 %v530
      %849 = vmatmul.mubr.bf16.gmra.mrb[0].mxu0 %v529
      %v850 = vpop.f32.mrb[0].mxu0
      %v851 = vadd.f32 %v337, %v850
      %v852 = vpop.f32.mrb[0].mxu0
      %v853 = vpop.f32.mrb[0].mxu0
      %v854 = vadd.f32 %v337, %v853
      %v855 = vpop.f32.mrb[0].mxu0
      %856 = vmatprep.mubr.bf16.mxu0 %v533
      %857 = vmatmul.mubr.bf16.gmra.mrb[0].mxu0 %v532
      %v858 = vpop.f32.mrb[0].mxu0
      %v859 = vadd.f32 %v337, %v858
      %v860 = vpop.f32.mrb[0].mxu0
      %v861 = vpop.f32.mrb[0].mxu0
      %v862 = vadd.f32 %v337, %v861
      %v863 = vpop.f32.mrb[0].mxu0
      %864 = vmatprep.mubr.bf16.mxu0 %v536
      %865 = vmatmul.mubr.bf16.gmra.mrb[0].mxu0 %v535
      %v866 = vpop.f32.mrb[0].mxu0
      %v867 = vadd.f32 %v337, %v866
      %v868 = vpop.f32.mrb[0].mxu0
      %v869 = vpop.f32.mrb[0].mxu0
      %v870 = vadd.f32 %v337, %v869
      %v871 = vpop.f32.mrb[0].mxu0
      %872 = vmatprep.mubr.bf16.mxu0 %v539
      %873 = vmatmul.mubr.bf16.gmra.mrb[0].mxu0 %v538
      %v874 = vpop.f32.mrb[0].mxu0
      %v875 = vadd.f32 %v337, %v874
      %v876 = vpop.f32.mrb[0].mxu0
      %v877 = vpop.f32.mrb[0].mxu0
      %v878 = vadd.f32 %v337, %v877
      %v879 = vpop.f32.mrb[0].mxu0
      %880 = vmatprep.mubr.bf16.mxu0 %v542
      %881 = vmatmul.mubr.bf16.gmra.mrb[0].mxu0 %v541
      %v882 = vpop.f32.mrb[0].mxu0
      %v883 = vadd.f32 %v337, %v882
      %v884 = vpop.f32.mrb[0].mxu0
      %v885 = vpop.f32.mrb[0].mxu0
      %v886 = vadd.f32 %v337, %v885
      %v887 = vpop.f32.mrb[0].mxu0
      %888 = vmatprep.mubr.bf16.mxu0 %v545
      %889 = vmatmul.mubr.bf16.gmra.mrb[0].mxu0 %v544
      %v890 = vpop.f32.mrb[0].mxu0
      %v891 = vadd.f32 %v337, %v890
      %v892 = vpop.f32.mrb[0].mxu0
      %v893 = vpop.f32.mrb[0].mxu0
      %v894 = vadd.f32 %v337, %v893
      %v895 = vpop.f32.mrb[0].mxu0
      %896 = vdwg.mxu0
      %897 = vmatprep.subr.bf16.mxu0 0
      %898 = vmatpush1.bf16.msra.mxu0 %v667
      %899 = vmatprep.subr.bf16.mxu0 0
      %900 = vmatpush1.bf16.msra.mxu0 %v668
      %901 = vmatprep.subr.bf16.mxu0 0
      %902 = vmatpush1.bf16.msra.mxu0 0
      %903 = vmatprep.subr.bf16.mxu0 0
      %904 = vmatpush1.bf16.msra.mxu0 0
      %905 = vmatprep.subr.bf16.mxu0 0
      %906 = vmatpush1.bf16.msra.mxu0 0
      %907 = vmatprep.subr.bf16.mxu0 0
      %908 = vmatpush1.bf16.msra.mxu0 0
      %909 = vmatprep.subr.bf16.mxu0 0
      %910 = vmatpush1.bf16.msra.mxu0 0
      %911 = vmatprep.subr.bf16.mxu0 0
      %912 = vmatpush1.bf16.msra.mxu0 0
      %913 = vmatprep.subr.bf16.mxu0 0
      %914 = vmatpush1.bf16.msra.mxu0 0
      %915 = vmatprep.subr.bf16.mxu0 0
      %916 = vmatpush1.bf16.msra.mxu0 0
      %917 = vmatprep.subr.bf16.mxu0 0
      %918 = vmatpush1.bf16.msra.mxu0 0
      %919 = vmatprep.subr.bf16.mxu0 0
      %920 = vmatpush1.bf16.msra.mxu0 0
      %921 = vmatprep.subr.bf16.mxu0 0
      %922 = vmatpush1.bf16.msra.mxu0 0
      %923 = vmatprep.subr.bf16.mxu0 0
      %924 = vmatpush1.bf16.msra.mxu0 0
      %925 = vmatprep.subr.bf16.mxu0 0
      %926 = vmatpush1.bf16.msra.mxu0 0
      %927 = vmatprep.subr.bf16.mxu0 0
      %928 = vmatpush1.bf16.msra.mxu0 0
      %929 = vmatprep.mubr.bf16.mxu0 0
      %930 = vmatmul.mubr.bf16.gmra.mrb[0].mxu0 %v689
      %v931 = vpop.f32.mrb[0].mxu0
      %v932 = vadd.f32 %v771, %v931
      %v933 = vpop.f32.mrb[0].mxu0
      %v934 = vpop.f32.mrb[0].mxu0
      %v935 = vadd.f32 %v774, %v934
      %v936 = vpop.f32.mrb[0].mxu0
      %937 = vmatprep.mubr.bf16.mxu0 0
      %938 = vmatmul.mubr.bf16.gmra.mrb[0].mxu0 %v692
      %v939 = vpop.f32.mrb[0].mxu0
      %v940 = vadd.f32 %v779, %v939
      %v941 = vpop.f32.mrb[0].mxu0
      %v942 = vpop.f32.mrb[0].mxu0
      %v943 = vadd.f32 %v782, %v942
      %v944 = vpop.f32.mrb[0].mxu0
      %945 = vmatprep.mubr.bf16.mxu0 0
      %946 = vmatmul.mubr.bf16.gmra.mrb[0].mxu0 %v695
      %v947 = vpop.f32.mrb[0].mxu0
      %v948 = vadd.f32 %v787, %v947
      %v949 = vpop.f32.mrb[0].mxu0
      %v950 = vpop.f32.mrb[0].mxu0
      %v951 = vadd.f32 %v790, %v950
      %v952 = vpop.f32.mrb[0].mxu0
      %953 = vmatprep.mubr.bf16.mxu0 0
      %954 = vmatmul.mubr.bf16.gmra.mrb[0].mxu0 %v698
      %v955 = vpop.f32.mrb[0].mxu0
      %v956 = vadd.f32 %v795, %v955
      %v957 = vpop.f32.mrb[0].mxu0
      %v958 = vpop.f32.mrb[0].mxu0
      %v959 = vadd.f32 %v798, %v958
      %v960 = vpop.f32.mrb[0].mxu0
      %961 = vmatprep.mubr.bf16.mxu0 0
      %962 = vmatmul.mubr.bf16.gmra.mrb[0].mxu0 %v701
      %v963 = vpop.f32.mrb[0].mxu0
      %v964 = vadd.f32 %v803, %v963
      %v965 = vpop.f32.mrb[0].mxu0
      %v966 = vpop.f32.mrb[0].mxu0
      %v967 = vadd.f32 %v806, %v966
      %v968 = vpop.f32.mrb[0].mxu0
      %969 = vmatprep.mubr.bf16.mxu0 0
      %970 = vmatmul.mubr.bf16.gmra.mrb[0].mxu0 %v704
      %v971 = vpop.f32.mrb[0].mxu0
      %v972 = vadd.f32 %v811, %v971
      %v973 = vpop.f32.mrb[0].mxu0
      %v974 = vpop.f32.mrb[0].mxu0
      %v975 = vadd.f32 %v814, %v974
      %v976 = vpop.f32.mrb[0].mxu0
      %977 = vmatprep.mubr.bf16.mxu0 0
      %978 = vmatmul.mubr.bf16.gmra.mrb[0].mxu0 %v707
      %v979 = vpop.f32.mrb[0].mxu0
      %v980 = vadd.f32 %v819, %v979
      %v981 = vpop.f32.mrb[0].mxu0
      %v982 = vpop.f32.mrb[0].mxu0
      %v983 = vadd.f32 %v822, %v982
      %v984 = vpop.f32.mrb[0].mxu0
      %985 = vmatprep.mubr.bf16.mxu0 0
      %986 = vmatmul.mubr.bf16.gmra.mrb[0].mxu0 %v710
      %v987 = vpop.f32.mrb[0].mxu0
      %v988 = vadd.f32 %v827, %v987
      %v989 = vpop.f32.mrb[0].mxu0
      %v990 = vpop.f32.mrb[0].mxu0
      %v991 = vadd.f32 %v830, %v990
      %v992 = vpop.f32.mrb[0].mxu0
      %993 = vmatprep.mubr.bf16.mxu0 0
      %994 = vmatmul.mubr.bf16.gmra.mrb[0].mxu0 %v713
      %v995 = vpop.f32.mrb[0].mxu0
      %v996 = vadd.f32 %v835, %v995
      %v997 = vpop.f32.mrb[0].mxu0
      %v998 = vpop.f32.mrb[0].mxu0
      %v999 = vadd.f32 %v838, %v998
      %v1000 = vpop.f32.mrb[0].mxu0
      %1001 = vmatprep.mubr.bf16.mxu0 0
      %1002 = vmatmul.mubr.bf16.gmra.mrb[0].mxu0 %v716
      %v1003 = vpop.f32.mrb[0].mxu0
      %v1004 = vadd.f32 %v843, %v1003
      %v1005 = vpop.f32.mrb[0].mxu0
      %v1006 = vpop.f32.mrb[0].mxu0
      %v1007 = vadd.f32 %v846, %v1006
      %v1008 = vpop.f32.mrb[0].mxu0
      %1009 = vmatprep.mubr.bf16.mxu0 0
      %1010 = vmatmul.mubr.bf16.gmra.mrb[0].mxu0 %v719
      %v1011 = vpop.f32.mrb[0].mxu0
      %v1012 = vadd.f32 %v851, %v1011
      %v1013 = vpop.f32.mrb[0].mxu0
      %v1014 = vpop.f32.mrb[0].mxu0
      %v1015 = vadd.f32 %v854, %v1014
      %v1016 = vpop.f32.mrb[0].mxu0
      %1017 = vmatprep.mubr.bf16.mxu0 0
      %1018 = vmatmul.mubr.bf16.gmra.mrb[0].mxu0 %v722
      %v1019 = vpop.f32.mrb[0].mxu0
      %v1020 = vadd.f32 %v859, %v1019
      %v1021 = vpop.f32.mrb[0].mxu0
      %v1022 = vpop.f32.mrb[0].mxu0
      %v1023 = vadd.f32 %v862, %v1022
      %v1024 = vpop.f32.mrb[0].mxu0
      %1025 = vmatprep.mubr.bf16.mxu0 0
      %1026 = vmatmul.mubr.bf16.gmra.mrb[0].mxu0 %v725
      %v1027 = vpop.f32.mrb[0].mxu0
      %v1028 = vadd.f32 %v867, %v1027
      %v1029 = vpop.f32.mrb[0].mxu0
      %v1030 = vpop.f32.mrb[0].mxu0
      %v1031 = vadd.f32 %v870, %v1030
      %v1032 = vpop.f32.mrb[0].mxu0
      %1033 = vmatprep.mubr.bf16.mxu0 0
      %1034 = vmatmul.mubr.bf16.gmra.mrb[0].mxu0 %v728
      %v1035 = vpop.f32.mrb[0].mxu0
      %v1036 = vadd.f32 %v875, %v1035
      %v1037 = vpop.f32.mrb[0].mxu0
      %v1038 = vpop.f32.mrb[0].mxu0
      %v1039 = vadd.f32 %v878, %v1038
      %v1040 = vpop.f32.mrb[0].mxu0
      %1041 = vmatprep.mubr.bf16.mxu0 0
      %1042 = vmatmul.mubr.bf16.gmra.mrb[0].mxu0 %v731
      %v1043 = vpop.f32.mrb[0].mxu0
      %v1044 = vadd.f32 %v883, %v1043
      %v1045 = vpop.f32.mrb[0].mxu0
      %v1046 = vpop.f32.mrb[0].mxu0
      %v1047 = vadd.f32 %v886, %v1046
      %v1048 = vpop.f32.mrb[0].mxu0
      %1049 = vmatprep.mubr.bf16.mxu0 0
      %1050 = vmatmul.mubr.bf16.gmra.mrb[0].mxu0 %v734
      %v1051 = vpop.f32.mrb[0].mxu0
      %v1052 = vadd.f32 %v891, %v1051
      %v1053 = vpop.f32.mrb[0].mxu0
      %v1054 = vpop.f32.mrb[0].mxu0
      %v1055 = vadd.f32 %v894, %v1054
      %v1056 = vpop.f32.mrb[0].mxu0
      %1057 = vdwg.mxu0
      %v1058 = vmax.f32 %v932, 0.0
      %v1059 = vmax.f32 %v935, 0.0
      %v1060 = vmax.f32 %v940, 0.0
      %v1061 = vmax.f32 %v943, 0.0
      %v1062 = vmax.f32 %v948, 0.0
      %v1063 = vmax.f32 %v951, 0.0
      %v1064 = vmax.f32 %v956, 0.0
      %v1065 = vmax.f32 %v959, 0.0
      %v1066 = vmax.f32 %v964, 0.0
      %v1067 = vmax.f32 %v967, 0.0
      %v1068 = vmax.f32 %v972, 0.0
      %v1069 = vmax.f32 %v975, 0.0
      %v1070 = vmax.f32 %v980, 0.0
      %v1071 = vmax.f32 %v983, 0.0
      %v1072 = vmax.f32 %v988, 0.0
      %v1073 = vmax.f32 %v991, 0.0
      %v1074 = vmax.f32 %v996, 0.0
      %v1075 = vmax.f32 %v999, 0.0
      %v1076 = vmax.f32 %v1004, 0.0
      %v1077 = vmax.f32 %v1007, 0.0
      %v1078 = vmax.f32 %v1012, 0.0
      %v1079 = vmax.f32 %v1015, 0.0
      %v1080 = vmax.f32 %v1020, 0.0
      %v1081 = vmax.f32 %v1023, 0.0
      %v1082 = vmax.f32 %v1028, 0.0
      %v1083 = vmax.f32 %v1031, 0.0
      %v1084 = vmax.f32 %v1036, 0.0
      %v1085 = vmax.f32 %v1039, 0.0
      %v1086 = vmax.f32 %v1044, 0.0
      %v1087 = vmax.f32 %v1047, 0.0
      %v1088 = vmax.f32 %v1052, 0.0
      %v1089 = vmax.f32 %v1055, 0.0
      %v1090 = vpack.c.bf16 %v1059, %v1058
      %v1091 = vpack.c.bf16 %v1061, %v1060
      %v1092 = vpack.c.bf16 %v1063, %v1062
      %v1093 = vpack.c.bf16 %v1065, %v1064
      %v1094 = vpack.c.bf16 %v1067, %v1066
      %v1095 = vpack.c.bf16 %v1069, %v1068
      %v1096 = vpack.c.bf16 %v1071, %v1070
      %v1097 = vpack.c.bf16 %v1073, %v1072
      %v1098 = vpack.c.bf16 %v1075, %v1074
      %v1099 = vpack.c.bf16 %v1077, %v1076
      %v1100 = vpack.c.bf16 %v1079, %v1078
      %v1101 = vpack.c.bf16 %v1081, %v1080
      %v1102 = vpack.c.bf16 %v1083, %v1082
      %v1103 = vpack.c.bf16 %v1085, %v1084
      %v1104 = vpack.c.bf16 %v1087, %v1086
      %v1105 = vpack.c.bf16 %v1089, %v1088
      %v1106 = vld [vmem:[%s3] sm:$0xf]
      %v1107 = vld [vmem:[%s3 + $0x4] sm:$0xf]
      %v1108 = vld [vmem:[%s3 + $0x8] sm:$0xf]
      %v1109 = vld [vmem:[%s3 + $0xc] sm:$0xf]
      %v1110 = vld [vmem:[%s4] sm:$0x1]
      %v1112 = vlaneseq
      %v1113 = vshrl.u32 %v1112, 7
      %v1114 = vsub.s32 0, %v1113
      %v1115 = vrot.slane %v1110, %v1114
      %v1121 = vunpack.c.l.b16 %v1106
      %v1122 = vunpack.c.l.b16 %v1107
      %v1123 = vunpack.c.l.b16 %v1108
      %v1124 = vunpack.c.l.b16 %v1109
      %v1125 = vpack.c.b16 %v1122, %v1121
      %v1126 = vpack.c.b16 %v1124, %v1123
      %v1130 = vsel %vm687, %v1090, 0
      %v1133 = vsel %vm687, %v1091, 0
      %v1136 = vsel %vm687, %v1092, 0
      %v1139 = vsel %vm687, %v1093, 0
      %v1142 = vsel %vm687, %v1094, 0
      %v1145 = vsel %vm687, %v1095, 0
      %v1148 = vsel %vm687, %v1096, 0
      %v1151 = vsel %vm687, %v1097, 0
      %v1154 = vsel %vm687, %v1098, 0
      %v1157 = vsel %vm687, %v1099, 0
      %v1160 = vsel %vm687, %v1100, 0
      %v1163 = vsel %vm687, %v1101, 0
      %v1166 = vsel %vm687, %v1102, 0
      %v1169 = vsel %vm687, %v1103, 0
      %v1172 = vsel %vm687, %v1104, 0
      %v1175 = vsel %vm687, %v1105, 0
      %1177 = vmatprep.subr.bf16.mxu0 0
      %1178 = vmatpush1.bf16.msra.mxu0 %v1125
      %1179 = vmatprep.subr.bf16.mxu0 0
      %1180 = vmatpush1.bf16.msra.mxu0 %v1126
      %1181 = vmatprep.subr.bf16.mxu0 0
      %1182 = vmatpush1.bf16.msra.mxu0 0
      %1183 = vmatprep.subr.bf16.mxu0 0
      %1184 = vmatpush1.bf16.msra.mxu0 0
      %1185 = vmatprep.subr.bf16.mxu0 0
      %1186 = vmatpush1.bf16.msra.mxu0 0
      %1187 = vmatprep.subr.bf16.mxu0 0
      %1188 = vmatpush1.bf16.msra.mxu0 0
      %1189 = vmatprep.subr.bf16.mxu0 0
      %1190 = vmatpush1.bf16.msra.mxu0 0
      %1191 = vmatprep.subr.bf16.mxu0 0
      %1192 = vmatpush1.bf16.msra.mxu0 0
      %1193 = vmatprep.subr.bf16.mxu0 0
      %1194 = vmatpush1.bf16.msra.mxu0 0
      %1195 = vmatprep.subr.bf16.mxu0 0
      %1196 = vmatpush1.bf16.msra.mxu0 0
      %1197 = vmatprep.subr.bf16.mxu0 0
      %1198 = vmatpush1.bf16.msra.mxu0 0
      %1199 = vmatprep.subr.bf16.mxu0 0
      %1200 = vmatpush1.bf16.msra.mxu0 0
      %1201 = vmatprep.subr.bf16.mxu0 0
      %1202 = vmatpush1.bf16.msra.mxu0 0
      %1203 = vmatprep.subr.bf16.mxu0 0
      %1204 = vmatpush1.bf16.msra.mxu0 0
      %1205 = vmatprep.subr.bf16.mxu0 0
      %1206 = vmatpush1.bf16.msra.mxu0 0
      %1207 = vmatprep.subr.bf16.mxu0 0
      %1208 = vmatpush1.bf16.msra.mxu0 0
      %1209 = vmatprep.mubr.bf16.mxu0 0
      %1210 = vmatmul.mubr.bf16.gmra.mrb[0].mxu0 %v1130
      %v1211 = vpop.f32.mrb[0].mxu0
      %v1212 = vadd.f32 %v1115, %v1211
      %v1213 = vpop.f32.mrb[0].mxu0
      %v1214 = vpop.f32.mrb[0].mxu0
      %v1215 = vadd.f32 %v1115, %v1214
      %v1216 = vpop.f32.mrb[0].mxu0
      %1217 = vmatprep.mubr.bf16.mxu0 0
      %1218 = vmatmul.mubr.bf16.gmra.mrb[0].mxu0 %v1133
      %v1219 = vpop.f32.mrb[0].mxu0
      %v1220 = vadd.f32 %v1115, %v1219
      %v1221 = vpop.f32.mrb[0].mxu0
      %v1222 = vpop.f32.mrb[0].mxu0
      %v1223 = vadd.f32 %v1115, %v1222
      %v1224 = vpop.f32.mrb[0].mxu0
      %1225 = vmatprep.mubr.bf16.mxu0 0
      %1226 = vmatmul.mubr.bf16.gmra.mrb[0].mxu0 %v1136
      %v1227 = vpop.f32.mrb[0].mxu0
      %v1228 = vadd.f32 %v1115, %v1227
      %v1229 = vpop.f32.mrb[0].mxu0
      %v1230 = vpop.f32.mrb[0].mxu0
      %v1231 = vadd.f32 %v1115, %v1230
      %v1232 = vpop.f32.mrb[0].mxu0
      %1233 = vmatprep.mubr.bf16.mxu0 0
      %1234 = vmatmul.mubr.bf16.gmra.mrb[0].mxu0 %v1139
      %v1235 = vpop.f32.mrb[0].mxu0
      %v1236 = vadd.f32 %v1115, %v1235
      %v1237 = vpop.f32.mrb[0].mxu0
      %v1238 = vpop.f32.mrb[0].mxu0
      %v1239 = vadd.f32 %v1115, %v1238
      %v1240 = vpop.f32.mrb[0].mxu0
      %1241 = vmatprep.mubr.bf16.mxu0 0
      %1242 = vmatmul.mubr.bf16.gmra.mrb[0].mxu0 %v1142
      %v1243 = vpop.f32.mrb[0].mxu0
      %v1244 = vadd.f32 %v1115, %v1243
      %v1245 = vpop.f32.mrb[0].mxu0
      %v1246 = vpop.f32.mrb[0].mxu0
      %v1247 = vadd.f32 %v1115, %v1246
      %v1248 = vpop.f32.mrb[0].mxu0
      %1249 = vmatprep.mubr.bf16.mxu0 0
      %1250 = vmatmul.mubr.bf16.gmra.mrb[0].mxu0 %v1145
      %v1251 = vpop.f32.mrb[0].mxu0
      %v1252 = vadd.f32 %v1115, %v1251
      %v1253 = vpop.f32.mrb[0].mxu0
      %v1254 = vpop.f32.mrb[0].mxu0
      %v1255 = vadd.f32 %v1115, %v1254
      %v1256 = vpop.f32.mrb[0].mxu0
      %1257 = vmatprep.mubr.bf16.mxu0 0
      %1258 = vmatmul.mubr.bf16.gmra.mrb[0].mxu0 %v1148
      %v1259 = vpop.f32.mrb[0].mxu0
      %v1260 = vadd.f32 %v1115, %v1259
      %v1261 = vpop.f32.mrb[0].mxu0
      %v1262 = vpop.f32.mrb[0].mxu0
      %v1263 = vadd.f32 %v1115, %v1262
      %v1264 = vpop.f32.mrb[0].mxu0
      %1265 = vmatprep.mubr.bf16.mxu0 0
      %1266 = vmatmul.mubr.bf16.gmra.mrb[0].mxu0 %v1151
      %v1267 = vpop.f32.mrb[0].mxu0
      %v1268 = vadd.f32 %v1115, %v1267
      %v1269 = vpop.f32.mrb[0].mxu0
      %v1270 = vpop.f32.mrb[0].mxu0
      %v1271 = vadd.f32 %v1115, %v1270
      %v1272 = vpop.f32.mrb[0].mxu0
      %1273 = vmatprep.mubr.bf16.mxu0 0
      %1274 = vmatmul.mubr.bf16.gmra.mrb[0].mxu0 %v1154
      %v1275 = vpop.f32.mrb[0].mxu0
      %v1276 = vadd.f32 %v1115, %v1275
      %v1277 = vpop.f32.mrb[0].mxu0
      %v1278 = vpop.f32.mrb[0].mxu0
      %v1279 = vadd.f32 %v1115, %v1278
      %v1280 = vpop.f32.mrb[0].mxu0
      %1281 = vmatprep.mubr.bf16.mxu0 0
      %1282 = vmatmul.mubr.bf16.gmra.mrb[0].mxu0 %v1157
      %v1283 = vpop.f32.mrb[0].mxu0
      %v1284 = vadd.f32 %v1115, %v1283
      %v1285 = vpop.f32.mrb[0].mxu0
      %v1286 = vpop.f32.mrb[0].mxu0
      %v1287 = vadd.f32 %v1115, %v1286
      %v1288 = vpop.f32.mrb[0].mxu0
      %1289 = vmatprep.mubr.bf16.mxu0 0
      %1290 = vmatmul.mubr.bf16.gmra.mrb[0].mxu0 %v1160
      %v1291 = vpop.f32.mrb[0].mxu0
      %v1292 = vadd.f32 %v1115, %v1291
      %v1293 = vpop.f32.mrb[0].mxu0
      %v1294 = vpop.f32.mrb[0].mxu0
      %v1295 = vadd.f32 %v1115, %v1294
      %v1296 = vpop.f32.mrb[0].mxu0
      %1297 = vmatprep.mubr.bf16.mxu0 0
      %1298 = vmatmul.mubr.bf16.gmra.mrb[0].mxu0 %v1163
      %v1299 = vpop.f32.mrb[0].mxu0
      %v1300 = vadd.f32 %v1115, %v1299
      %v1301 = vpop.f32.mrb[0].mxu0
      %v1302 = vpop.f32.mrb[0].mxu0
      %v1303 = vadd.f32 %v1115, %v1302
      %v1304 = vpop.f32.mrb[0].mxu0
      %1305 = vmatprep.mubr.bf16.mxu0 0
      %1306 = vmatmul.mubr.bf16.gmra.mrb[0].mxu0 %v1166
      %v1307 = vpop.f32.mrb[0].mxu0
      %v1308 = vadd.f32 %v1115, %v1307
      %v1309 = vpop.f32.mrb[0].mxu0
      %v1310 = vpop.f32.mrb[0].mxu0
      %v1311 = vadd.f32 %v1115, %v1310
      %v1312 = vpop.f32.mrb[0].mxu0
      %1313 = vmatprep.mubr.bf16.mxu0 0
      %1314 = vmatmul.mubr.bf16.gmra.mrb[0].mxu0 %v1169
      %v1315 = vpop.f32.mrb[0].mxu0
      %v1316 = vadd.f32 %v1115, %v1315
      %v1317 = vpop.f32.mrb[0].mxu0
      %v1318 = vpop.f32.mrb[0].mxu0
      %v1319 = vadd.f32 %v1115, %v1318
      %v1320 = vpop.f32.mrb[0].mxu0
      %1321 = vmatprep.mubr.bf16.mxu0 0
      %1322 = vmatmul.mubr.bf16.gmra.mrb[0].mxu0 %v1172
      %v1323 = vpop.f32.mrb[0].mxu0
      %v1324 = vadd.f32 %v1115, %v1323
      %v1325 = vpop.f32.mrb[0].mxu0
      %v1326 = vpop.f32.mrb[0].mxu0
      %v1327 = vadd.f32 %v1115, %v1326
      %v1328 = vpop.f32.mrb[0].mxu0
      %1329 = vmatprep.mubr.bf16.mxu0 0
      %1330 = vmatmul.mubr.bf16.gmra.mrb[0].mxu0 %v1175
      %v1331 = vpop.f32.mrb[0].mxu0
      %v1332 = vadd.f32 %v1115, %v1331
      %v1333 = vpop.f32.mrb[0].mxu0
      %v1334 = vpop.f32.mrb[0].mxu0
      %v1335 = vadd.f32 %v1115, %v1334
      %v1336 = vpop.f32.mrb[0].mxu0
      %1337 = vdwg.mxu0
      %1338 = vst [vmem:[%s229] sm:$0xff] %v1212
      %1339 = vst [vmem:[%s229 + $0x8] sm:$0xff] %v1215
      %1340 = vst [vmem:[%s229 + $0x10] sm:$0xff] %v1220
      %1341 = vst [vmem:[%s229 + $0x18] sm:$0xff] %v1223
      %1342 = vst [vmem:[%s229 + $0x20] sm:$0xff] %v1228
      %1343 = vst [vmem:[%s229 + $0x28] sm:$0xff] %v1231
      %1344 = vst [vmem:[%s229 + $0x30] sm:$0xff] %v1236
      %1345 = vst [vmem:[%s229 + $0x38] sm:$0xff] %v1239
      %1346 = vst [vmem:[%s229 + $0x40] sm:$0xff] %v1244
      %1347 = vst [vmem:[%s229 + $0x48] sm:$0xff] %v1247
      %1348 = vst [vmem:[%s229 + $0x50] sm:$0xff] %v1252
      %1349 = vst [vmem:[%s229 + $0x58] sm:$0xff] %v1255
      %1350 = vst [vmem:[%s229 + $0x60] sm:$0xff] %v1260
      %1351 = vst [vmem:[%s229 + $0x68] sm:$0xff] %v1263
      %1352 = vst [vmem:[%s229 + $0x70] sm:$0xff] %v1268
      %1353 = vst [vmem:[%s229 + $0x78] sm:$0xff] %v1271
      %1354 = vst [vmem:[%s229 + $0x80] sm:$0xff] %v1276
      %1355 = vst [vmem:[%s229 + $0x88] sm:$0xff] %v1279
      %1356 = vst [vmem:[%s229 + $0x90] sm:$0xff] %v1284
      %1357 = vst [vmem:[%s229 + $0x98] sm:$0xff] %v1287
      %1358 = vst [vmem:[%s229 + $0xa0] sm:$0xff] %v1292
      %1359 = vst [vmem:[%s229 + $0xa8] sm:$0xff] %v1295
      %1360 = vst [vmem:[%s229 + $0xb0] sm:$0xff] %v1300
      %1361 = vst [vmem:[%s229 + $0xb8] sm:$0xff] %v1303
      %1362 = vst [vmem:[%s229 + $0xc0] sm:$0xff] %v1308
      %1363 = vst [vmem:[%s229 + $0xc8] sm:$0xff] %v1311
      %1364 = vst [vmem:[%s229 + $0xd0] sm:$0xff] %v1316
      %1365 = vst [vmem:[%s229 + $0xd8] sm:$0xff] %v1319
      %1366 = vst [vmem:[%s229 + $0xe0] sm:$0xff] %v1324
      %1367 = vst [vmem:[%s229 + $0xe8] sm:$0xff] %v1327
      %1368 = vst [vmem:[%s229 + $0xf0] sm:$0xff] %v1332
      %1369 = vst [vmem:[%s229 + $0xf8] sm:$0xff] %v1335
      %s1370 = smul.u32 32, %s16
      %p1371 = scmp.lt.s32.totalorder %s1370, 191
      %s1372 = scalar_select %p1371, %s1370, 191
      %s1373 = smul.addr %s1372, 8
      %s1374 = scalar_lea.vmem %s5, %s1373
      // Predicated region
      $region41: #{device_forward.5} parent=39 // pred_check
        %p1375 = pneg %p144
      $region42: #{device_forward.5} parent=39 // pred_check_branch
        %1377 = sbr.rel (%p1375) target = $region44
      $region43: #{device_forward.5} parent=39 // pred_region
        %s1378 = smul.u32 32, %s16
      $region44: #{device_forward.5} parent=39 // pred_fallthru
        _
    $region40: #{device_forward.5} parent=5 // pred_fallthru
      _
    %p1379 = scmp.le.s32.totalorder 2, %s11
    // Predicated region
    $region45: #{device_forward.5} parent=5 // pred_check
      %p1380 = pneg %p1379
    $region46: #{device_forward.5} parent=5 // pred_check_branch
      %1382 = sbr.rel (%p1380) target = $region48
    $region47: #{device_forward.5} parent=5 // pred_region
      %s1383 = ssub.s32 %s11, 2
      // Predicated region
      $region49: #{device_forward.5} parent=47 // pred_check
        %p1384 = pneg %p150
      $region50: #{device_forward.5} parent=47 // pred_check_branch
        %1386 = sbr.rel (%p1384) target = $region52
      $region51: #{device_forward.5} parent=47 // pred_region
        %s1387 = smul.u32 32, %s17
        %p1388 = scmp.lt.s32.totalorder %s1387, 191
        %s1389 = scalar_select %p1388, %s1387, 191
        %s1390 = smul.addr %s1389, 8
        %s1391 = scalar_lea.vmem %s5, %s1390
      $region52: #{device_forward.5} parent=47 // pred_fallthru
        _
    $region48: #{device_forward.5} parent=5 // pred_fallthru
      _
  $region6: #{device_forward.5} parent=0 // loop_footer
    %s15 = sadd.s32 1, %s11
  $region7: #{device_forward.5} parent=0 // loop_footer_branch
    %10 = sbr.rel target = $region3
  $region8: #{device_forward.5} parent=0 // loop_exit
    _

</llo_original>
